<compile_context>
chip_gen: v7x
topology: tpu7x:2x2x1
jax: 0.10.0
libtpu: 0.0.40
codegen_flags: <defaults>
</compile_context>

<pallas_src>
import functools
import math

import jax
import jax.numpy as jnp
from jax.experimental import pallas as pl
from jax.experimental.pallas import tpu as pltpu

_HI = jax.lax.Precision.HIGHEST


def _dropout_and_normalize(e, denom, seed_ref, dropout_p):
    """softmax numerator e / denom, with optional inverted dropout folded in."""
    if seed_ref is None:
        return e * pl.reciprocal(denom, approx=False)
    # Training-mode dropout (F.dropout default). Fold the 1/(1-p) keep-scale into the
    # per-row reciprocal (one extra mul on the (rows,1) denominator instead of a
    # per-element mul over the whole score tensor).
    pltpu.prng_seed(seed_ref[0] + pl.program_id(0))
    bits = pltpu.bitcast(pltpu.prng_random_bits(e.shape), jnp.uint32)
    threshold = min(int(dropout_p * 4294967296.0), 4294967295)  # clamp: avoid uint32 wrap
    keep = bits >= jnp.uint32(threshold)
    p = e * pl.reciprocal(denom * (1.0 - dropout_p), approx=False)
    return jnp.where(keep, p, 0.0)


def _attn_kernel(*refs, scale, dropout_p, flatten):
    if 0.0 < dropout_p < 1.0:
        seed_ref, q_ref, k_ref, v_ref, o_ref = refs
    else:
        seed_ref = None
        q_ref, k_ref, v_ref, o_ref = refs

    BB, Lq, D = q_ref.shape
    Lk = k_ref.shape[1]

    if flatten:
        # Lq == 1: fold the batch into the matmul M/N dims -> lane-dense (BB, BB*Lk) scores.
        q2 = q_ref[...].reshape(BB, D)           # (BB, D)
        k2 = k_ref[...].reshape(BB * Lk, D)      # (BB*Lk, D)
        v2 = v_ref[...].reshape(BB * Lk, D)      # (BB*Lk, D)

        s = jnp.einsum("md,nd->mn", q2, k2,
                       preferred_element_type=jnp.float32,
                       precision=_HI) * scale                         # (BB, BB*Lk)

        # Block-diagonal mask: row b only attends to its own Lk keys.
        rows = jax.lax.broadcasted_iota(jnp.int32, (BB, BB * Lk), 0)
        cols = jax.lax.broadcasted_iota(jnp.int32, (BB, BB * Lk), 1)
        valid = (cols >= rows * Lk) & (cols < (rows + 1) * Lk)
        s = jnp.where(valid, s, -1e30)

        m = jnp.max(s, axis=-1, keepdims=True)
        e = jnp.exp(s - m)                                             # masked lanes -> 0
        denom = jnp.sum(e, axis=-1, keepdims=True)
        p = _dropout_and_normalize(e, denom, seed_ref, dropout_p)

        o = jnp.einsum("mn,nd->md", p.astype(v2.dtype), v2,
                       preferred_element_type=jnp.float32,
                       precision=_HI)                                  # (BB, D)
        o_ref[...] = o.reshape(BB, Lq, D).astype(o_ref.dtype)
    else:
        # General Lq: batched einsums.
        q = q_ref[...]
        k = k_ref[...]
        v = v_ref[...]
        s = jnp.einsum("bqd,bkd->bqk", q, k,
                       preferred_element_type=jnp.float32,
                       precision=_HI) * scale                          # (BB, Lq, Lk)
        m = jnp.max(s, axis=-1, keepdims=True)
        e = jnp.exp(s - m)
        denom = jnp.sum(e, axis=-1, keepdims=True)
        p = _dropout_and_normalize(e, denom, seed_ref, dropout_p)
        o = jnp.einsum("bqk,bkd->bqd", p.astype(v.dtype), v,
                       preferred_element_type=jnp.float32,
                       precision=_HI)                                  # (BB, Lq, D)
        o_ref[...] = o.astype(o_ref.dtype)


def sdpa_pallas(query, key, value, dropout_p, seed=0, batch_tile=None):
    """query: (B, Lq, D), key/value: (B, Lk, D) -> (B, Lq, D)."""
    B, Lq, D = query.shape
    _, Lk, _ = key.shape
    scale = float(math.pow(D, 0.5))  # module: scale_factor = d_k ** 0.5, applied with .mul()
    dropout_p = float(dropout_p)

    if dropout_p >= 1.0:
        # F.dropout(p=1) zeroes the whole tensor -> output is exact zeros.
        # Skip the Mosaic launch entirely (launch overhead >> the 4 KiB fill).
        return jnp.zeros((B, Lq, D), dtype=query.dtype)

    # Batch is processed in a single grid step by default (tiny shapes: per-step overhead
    # would dominate). For larger B on v7x, pass batch_tile=B//2 to shard the grid across
    # both TensorCores via the "parallel" dimension semantics.
    BB = B if batch_tile is None else min(int(batch_tile), B)
    assert B % BB == 0, "batch must be divisible by batch_tile"
    grid = (B // BB,)

    use_dropout = dropout_p > 0.0
    if use_dropout:
        q_map = lambda b, seed: (b, 0, 0)
        kv_map = lambda b, seed: (b, 0, 0)
    else:
        q_map = lambda b: (b, 0, 0)
        kv_map = lambda b: (b, 0, 0)

    in_specs = [
        pl.BlockSpec((BB, Lq, D), q_map),
        pl.BlockSpec((BB, Lk, D), kv_map),
        pl.BlockSpec((BB, Lk, D), kv_map),
    ]
    out_specs = pl.BlockSpec((BB, Lq, D), q_map)

    itemsize = query.dtype.itemsize
    cost = pl.CostEstimate(
        flops=2 * 2 * B * Lq * Lk * D,
        transcendentals=B * Lq * Lk,
        bytes_accessed=(query.size + key.size + value.size + B * Lq * D) * itemsize,
    )

    kernel = functools.partial(_attn_kernel, scale=scale, dropout_p=dropout_p,
                               flatten=(Lq == 1))

    # TODO(synk): for large Lk, switch to an Lk-tiled online-softmax (flash-style) path;
    # budget VMEM per step as 2x double-buffered (BB*tk*D) K/V tiles + BB*Lq*tk f32 scores
    # + BB*Lq*D f32 accumulator, keeping it under ~32 MiB scoped VMEM on v7x (64 MiB phys).
    args = (query, key, value)
    if use_dropout:
        args = (jnp.array([seed], dtype=jnp.int32),) + args

    return pl.pallas_call(
        kernel,
        out_shape=jax.ShapeDtypeStruct((B, Lq, D), query.dtype),
        grid_spec=pltpu.PrefetchScalarGridSpec(
            num_scalar_prefetch=1 if use_dropout else 0,
            grid=grid,
            in_specs=in_specs,
            out_specs=out_specs,
        ),
        compiler_params=pltpu.CompilerParams(
            dimension_semantics=("parallel",),
        ),
        cost_estimate=cost,
    )(*args)


def sdpa_ref(query, key, value, dropout_p):
    """Pure-JAX reference (dropout_p must be 0 or >=1 to be deterministic)."""
    scale = math.pow(query.shape[-1], 0.5)
    qk = jnp.einsum("bqd,bkd->bqk", query, key, precision=_HI) * scale
    p = jax.nn.softmax(qk, axis=-1)
    if float(dropout_p) >= 1.0:
        p = jnp.zeros_like(p)
    return jnp.einsum("bqk,bkd->bqd", p, value, precision=_HI)


if __name__ == "__main__":
    # Small shapes consistent with the module: query (B, 1, D), key/value (B, 40, D).
    B, Lq, Lk, D = 8, 1, 40, 128
    k0, k1, k2 = jax.random.split(jax.random.PRNGKey(0), 3)
    query = jax.random.normal(k0, (B, Lq, D), dtype=jnp.float32)
    key = jax.random.normal(k1, (B, Lk, D), dtype=jnp.float32)
    value = jax.random.normal(k2, (B, Lk, D), dtype=jnp.float32)

    # Production case: the module is called with dropout_p = 1 -> exact zeros.
    out = jax.block_until_ready(sdpa_pallas(query, key, value, dropout_p=1.0))
    assert out.shape == (B, Lq, D)
    assert jnp.allclose(out, sdpa_ref(query, key, value, 1.0), atol=1e-6)

    # Attention-math check with dropout disabled (p = 0): exercises the Pallas kernel.
    out_nodrop = jax.block_until_ready(sdpa_pallas(query, key, value, dropout_p=0.0))
    ref_nodrop = sdpa_ref(query, key, value, 0.0)
    max_err = float(jnp.max(jnp.abs(out_nodrop - ref_nodrop)))
    assert jnp.allclose(out_nodrop, ref_nodrop, atol=5e-3, rtol=5e-3), max_err

    print("KERNEL_OK")
</pallas_src>

<mosaic_0001>
module attributes {stable_mosaic.version = 11 : i64} {
  func.func @_attn_kernel(%arg0: i32, %arg1: memref<8x1x128xf32, #tpu.memory_space<vmem>>, %arg2: memref<8x40x128xf32, #tpu.memory_space<vmem>>, %arg3: memref<8x40x128xf32, #tpu.memory_space<vmem>>, %arg4: memref<8x1x128xf32, #tpu.memory_space<vmem>>) attributes {dimension_semantics = [#tpu.dimension_semantics<parallel>], iteration_bounds = array<i64: 1>, scalar_prefetch = 0 : i64, scratch_operands = 0 : i64, tpu.core_type = #tpu.core_type<tc>, window_params = [{transform_indices = @transform_0, window_bounds = array<i64: 8, 1, 128>}, {transform_indices = @transform_1, window_bounds = array<i64: 8, 40, 128>}, {transform_indices = @transform_2, window_bounds = array<i64: 8, 40, 128>}, {transform_indices = @transform_3, window_bounds = array<i64: 8, 1, 128>}]} {
    %c0 = arith.constant 0 : index
    %c0_0 = arith.constant 0 : index
    %c0_1 = arith.constant 0 : index
    %0 = vector.load %arg1[%c0, %c0_0, %c0_1] : memref<8x1x128xf32, #tpu.memory_space<vmem>>, vector<8x1x128xf32>
    %1 = vector.shape_cast %0 : vector<8x1x128xf32> to vector<8x128xf32>
    %c0_2 = arith.constant 0 : index
    %c0_3 = arith.constant 0 : index
    %c0_4 = arith.constant 0 : index
    %2 = vector.load %arg2[%c0_2, %c0_3, %c0_4] : memref<8x40x128xf32, #tpu.memory_space<vmem>>, vector<8x40x128xf32>
    %3 = vector.shape_cast %2 : vector<8x40x128xf32> to vector<320x128xf32>
    %c0_5 = arith.constant 0 : index
    %c0_6 = arith.constant 0 : index
    %c0_7 = arith.constant 0 : index
    %4 = vector.load %arg3[%c0_5, %c0_6, %c0_7] : memref<8x40x128xf32, #tpu.memory_space<vmem>>, vector<8x40x128xf32>
    %5 = vector.shape_cast %4 : vector<8x40x128xf32> to vector<320x128xf32>
    "tpu.trace_start"() <{level = 10 : i32, message = "md,nd->mn"}> : () -> ()
    %cst = arith.constant dense<0.000000e+00> : vector<8x320xf32>
    %6 = tpu.matmul %1, %3, %cst {dimension_numbers = #tpu.dot_dimension_numbers<[1], [1], [0], [0], [0, 0, 1, 0], [], []>, precision = #tpu.contract_precision<fp32>} : vector<8x128xf32>, vector<320x128xf32>, vector<8x320xf32> -> vector<8x320xf32>
    "tpu.trace_stop"() : () -> ()
    %cst_8 = arith.constant 11.3137083 : f32
    %7 = vector.broadcast %cst_8 : f32 to vector<8x320xf32>
    %8 = arith.mulf %6, %7 : vector<8x320xf32>
    %9 = tpu.iota {dimensions = array<i32: 0>} : vector<8x320xi32>
    %10 = tpu.iota {dimensions = array<i32: 1>} : vector<8x320xi32>
    %c40_i32 = arith.constant 40 : i32
    %11 = vector.broadcast %c40_i32 : i32 to vector<8x320xi32>
    %12 = arith.muli %9, %11 : vector<8x320xi32>
    %13 = arith.cmpi sge, %10, %12 : vector<8x320xi32>
    %c1_i32 = arith.constant 1 : i32
    %14 = vector.broadcast %c1_i32 : i32 to vector<8x320xi32>
    %15 = arith.addi %9, %14 : vector<8x320xi32>
    %c40_i32_9 = arith.constant 40 : i32
    %16 = vector.broadcast %c40_i32_9 : i32 to vector<8x320xi32>
    %17 = arith.muli %15, %16 : vector<8x320xi32>
    %18 = arith.cmpi slt, %10, %17 : vector<8x320xi32>
    %19 = arith.andi %13, %18 : vector<8x320xi1>
    %cst_10 = arith.constant -1.000000e+30 : f32
    %20 = vector.broadcast %cst_10 : f32 to vector<8x320xf32>
    %21 = arith.select %19, %8, %20 : vector<8x320xi1>, vector<8x320xf32>
    %cst_11 = arith.constant dense<0xFF800000> : vector<8xf32>
    %22 = vector.multi_reduction <maximumf>, %21, %cst_11 [1] : vector<8x320xf32> to vector<8xf32>
    %23 = vector.shape_cast %22 : vector<8xf32> to vector<8x1xf32>
    %24 = vector.broadcast %23 : vector<8x1xf32> to vector<8x320xf32>
    %25 = arith.subf %21, %24 : vector<8x320xf32>
    %26 = math.exp %25 : vector<8x320xf32>
    %cst_12 = arith.constant dense<0.000000e+00> : vector<8xf32>
    %27 = vector.multi_reduction <add>, %26, %cst_12 [1] : vector<8x320xf32> to vector<8xf32>
    %28 = vector.shape_cast %27 : vector<8xf32> to vector<8x1xf32>
    %29 = tpu.reciprocal %28 : vector<8x1xf32> -> vector<8x1xf32>
    %30 = vector.broadcast %29 : vector<8x1xf32> to vector<8x320xf32>
    %31 = arith.mulf %26, %30 : vector<8x320xf32>
    "tpu.trace_start"() <{level = 10 : i32, message = "mn,nd->md"}> : () -> ()
    %cst_13 = arith.constant dense<0.000000e+00> : vector<8x128xf32>
    %32 = tpu.matmul %31, %5, %cst_13 {dimension_numbers = #tpu.dot_dimension_numbers<[1], [0], [0], [1], [0, 0, 1, 1], [], []>, precision = #tpu.contract_precision<fp32>} : vector<8x320xf32>, vector<320x128xf32>, vector<8x128xf32> -> vector<8x128xf32>
    "tpu.trace_stop"() : () -> ()
    %33 = vector.shape_cast %32 : vector<8x128xf32> to vector<8x1x128xf32>
    %c0_14 = arith.constant 0 : index
    %c0_15 = arith.constant 0 : index
    %c0_16 = arith.constant 0 : index
    %34 = vector.load %arg4[%c0_14, %c0_15, %c0_16] : memref<8x1x128xf32, #tpu.memory_space<vmem>>, vector<8x1x128xf32>
    tpu.vector_store %arg4[%c0_14, %c0_15, %c0_16], %33 {strides = array<i32>} : memref<8x1x128xf32, #tpu.memory_space<vmem>>, vector<8x1x128xf32>,
    return
  }
  func.func @transform_0(%arg0: i32) -> (i32, i32, i32) {
    %c0_i32 = arith.constant 0 : i32
    %c0_i32_0 = arith.constant 0 : i32
    %c0_i32_1 = arith.constant 0 : i32
    return %arg0, %c0_i32, %c0_i32_0 : i32, i32, i32
  }
  func.func @transform_1(%arg0: i32) -> (i32, i32, i32) {
    %c0_i32 = arith.constant 0 : i32
    %c0_i32_0 = arith.constant 0 : i32
    %c0_i32_1 = arith.constant 0 : i32
    return %arg0, %c0_i32, %c0_i32_0 : i32, i32, i32
  }
  func.func @transform_2(%arg0: i32) -> (i32, i32, i32) {
    %c0_i32 = arith.constant 0 : i32
    %c0_i32_0 = arith.constant 0 : i32
    %c0_i32_1 = arith.constant 0 : i32
    return %arg0, %c0_i32, %c0_i32_0 : i32, i32, i32
  }
  func.func @transform_3(%arg0: i32) -> (i32, i32, i32) {
    %c0_i32 = arith.constant 0 : i32
    %c0_i32_0 = arith.constant 0 : i32
    %c0_i32_1 = arith.constant 0 : i32
    return %arg0, %c0_i32, %c0_i32_0 : i32, i32, i32
  }
}

</mosaic_0001>

<llo_original>
// kernel: tpu_custom_call.1
$region0: #{tpu_custom_call.1}
  #allocation0 [shape = 'u32[]', space=smem, size = 0x4, offset = 0x4, fixed_abs, tag = 'smem constant byte address 0x4 - core index']
  #allocation1 [shape = 'u32[144,128]{1,0:T(1,128)}', space=vmem, size = 0x12000, scoped, tag = 'internal scratch']
  %s0 = inlined_call_operand.hbm [shape: f32[8,1,128], index: 0, kind: input, shape index: {}]
  %s1 = inlined_call_operand.hbm [shape: f32[8,40,128], index: 1, kind: input, shape index: {}]
  %s2 = inlined_call_operand.hbm [shape: f32[8,40,128], index: 2, kind: input, shape index: {}]
  %s3 = inlined_call_operand.hbm [shape: f32[8,1,128], index: 3, kind: output, shape index: {}]
  %s4 = sld [smem:[#allocation0]]
  $region34: #{tpu_custom_call.1} parent=0
    _
  %s6 = ssub.s32 1, %s4
  %s7 = scalar_select 0, %s6, %s4
  $region1: #{tpu_custom_call.1} parent=0
    #allocation2 [shape = 'u8[4096]{0}', space=vmem, size = 0x1000, scoped, tag = 'input window, operand 0, single buffered']
    #allocation3 [shape = 's32[1]{0}', space=sflag, size = 0x4, scoped, tag = 'scoped memory for tpu_custom_call.1']
    #allocation4 [shape = 's32[1]{0}', space=sflag, size = 0x4, scoped, tag = 'scoped memory for tpu_custom_call.1']
    #allocation5 [shape = 'u8[163840]{0}', space=vmem, size = 0x28000, scoped, tag = 'input window, operand 1, single buffered']
    #allocation6 [shape = 's32[1]{0}', space=sflag, size = 0x4, scoped, tag = 'scoped memory for tpu_custom_call.1']
    #allocation7 [shape = 'u8[163840]{0}', space=vmem, size = 0x28000, scoped, tag = 'input window, operand 2, single buffered']
    #allocation8 [shape = 'u8[4096]{0}', space=vmem, size = 0x1000, scoped, tag = 'output window, operand 0, single buffered']
    %8 = vsyncpa [#allocation3], 0
    %9 = vsyncpa [#allocation6], 0
    %10 = vsyncpa [#allocation4], 0
    // Predicated region
    $region2: #{tpu_custom_call.1} parent=1 // pred_check
      _
    $region3: #{tpu_custom_call.1} parent=1 // pred_check_branch
      %12 = sbr.rel (0) target = $region5
    $region4: #{tpu_custom_call.1} parent=1 // pred_region
      %s14 = ssub.s32 128, 128
      %15 = vsyncadd [#allocation3], %s14
      %s16 = sshll.u32 [#allocation2], 4
      %s17 = int_to_ptr.vmem [resolvable:$true] %s16
      %22 = dma.hbm_to_vmem [thread:$0]  %s0, 128, %s17, [#allocation3], 16, 16, 1
    $region5: #{tpu_custom_call.1} parent=1 // pred_fallthru
      _
    // Predicated region
    $region6: #{tpu_custom_call.1} parent=1 // pred_check
      _
    $region7: #{tpu_custom_call.1} parent=1 // pred_check_branch
      %24 = sbr.rel (0) target = $region9
    $region8: #{tpu_custom_call.1} parent=1 // pred_region
      %s26 = ssub.s32 5120, 5120
      %27 = vsyncadd [#allocation6], %s26
      %s28 = sshll.u32 [#allocation5], 4
      %s29 = int_to_ptr.vmem [resolvable:$true] %s28
      %34 = dma.hbm_to_vmem [thread:$0]  %s1, 5120, %s29, [#allocation6], 128, 128, 8
    $region9: #{tpu_custom_call.1} parent=1 // pred_fallthru
      _
    // Predicated region
    $region10: #{tpu_custom_call.1} parent=1 // pred_check
      _
    $region11: #{tpu_custom_call.1} parent=1 // pred_check_branch
      %36 = sbr.rel (0) target = $region13
    $region12: #{tpu_custom_call.1} parent=1 // pred_region
      %s38 = ssub.s32 5120, 5120
      %39 = vsyncadd [#allocation6], %s38
      %s40 = sshll.u32 [#allocation7], 4
      %s41 = int_to_ptr.vmem [resolvable:$true] %s40
      %46 = dma.hbm_to_vmem [thread:$0]  %s2, 5120, %s41, [#allocation6], 128, 128, 8
    $region13: #{tpu_custom_call.1} parent=1 // pred_fallthru
      _
    // Predicated region
    $region14: #{tpu_custom_call.1} parent=1 // pred_check
      _
    $region15: #{tpu_custom_call.1} parent=1 // pred_check_branch
      %48 = sbr.rel (0) target = $region17
    $region16: #{tpu_custom_call.1} parent=1 // pred_region
      %49 = dma.done [#allocation3], 128
    $region17: #{tpu_custom_call.1} parent=1 // pred_fallthru
      _
    // Predicated region
    $region18: #{tpu_custom_call.1} parent=1 // pred_check
      _
    $region19: #{tpu_custom_call.1} parent=1 // pred_check_branch
      %51 = sbr.rel (0) target = $region21
    $region20: #{tpu_custom_call.1} parent=1 // pred_region
      %52 = dma.done [#allocation6], 5120
    $region21: #{tpu_custom_call.1} parent=1 // pred_fallthru
      _
    // Predicated region
    $region22: #{tpu_custom_call.1} parent=1 // pred_check
      _
    $region23: #{tpu_custom_call.1} parent=1 // pred_check_branch
      %54 = sbr.rel (0) target = $region25
    $region24: #{tpu_custom_call.1} parent=1 // pred_region
      %55 = dma.done [#allocation6], 5120
    $region25: #{tpu_custom_call.1} parent=1 // pred_fallthru
      _
    %v56 = vld [vmem:[#allocation2] sm:$0x1]
    %v57 = vld [vmem:[#allocation2 + $0x1] sm:$0x1]
    %v58 = vld [vmem:[#allocation2 + $0x2] sm:$0x1]
    %v59 = vld [vmem:[#allocation2 + $0x3] sm:$0x1]
    %v60 = vld [vmem:[#allocation2 + $0x4] sm:$0x1]
    %v61 = vld [vmem:[#allocation2 + $0x5] sm:$0x1]
    %v62 = vld [vmem:[#allocation2 + $0x6] sm:$0x1]
    %v63 = vld [vmem:[#allocation2 + $0x7] sm:$0x1]
    %v64 = vld [vmem:[#allocation5] sm:$0xff]
    %v65 = vld [vmem:[#allocation5 + $0x8] sm:$0xff]
    %v66 = vld [vmem:[#allocation5 + $0x10] sm:$0xff]
    %v67 = vld [vmem:[#allocation5 + $0x18] sm:$0xff]
    %v68 = vld [vmem:[#allocation5 + $0x20] sm:$0xff]
    %v69 = vld [vmem:[#allocation5 + $0x28] sm:$0xff]
    %v70 = vld [vmem:[#allocation5 + $0x30] sm:$0xff]
    %v71 = vld [vmem:[#allocation5 + $0x38] sm:$0xff]
    %v72 = vld [vmem:[#allocation5 + $0x40] sm:$0xff]
    %v73 = vld [vmem:[#allocation5 + $0x48] sm:$0xff]
    %v74 = vld [vmem:[#allocation5 + $0x50] sm:$0xff]
    %v75 = vld [vmem:[#allocation5 + $0x58] sm:$0xff]
    %v76 = vld [vmem:[#allocation5 + $0x60] sm:$0xff]
    %v77 = vld [vmem:[#allocation5 + $0x68] sm:$0xff]
    %v78 = vld [vmem:[#allocation5 + $0x70] sm:$0xff]
    %v79 = vld [vmem:[#allocation5 + $0x78] sm:$0xff]
    %v80 = vld [vmem:[#allocation5 + $0x80] sm:$0xff]
    %v81 = vld [vmem:[#allocation5 + $0x88] sm:$0xff]
    %v82 = vld [vmem:[#allocation5 + $0x90] sm:$0xff]
    %v83 = vld [vmem:[#allocation5 + $0x98] sm:$0xff]
    %v84 = vld [vmem:[#allocation5 + $0xa0] sm:$0xff]
    %v85 = vld [vmem:[#allocation5 + $0xa8] sm:$0xff]
    %v86 = vld [vmem:[#allocation5 + $0xb0] sm:$0xff]
    %v87 = vld [vmem:[#allocation5 + $0xb8] sm:$0xff]
    %v88 = vld [vmem:[#allocation5 + $0xc0] sm:$0xff]
    %v89 = vld [vmem:[#allocation5 + $0xc8] sm:$0xff]
    %v90 = vld [vmem:[#allocation5 + $0xd0] sm:$0xff]
    %v91 = vld [vmem:[#allocation5 + $0xd8] sm:$0xff]
    %v92 = vld [vmem:[#allocation5 + $0xe0] sm:$0xff]
    %v93 = vld [vmem:[#allocation5 + $0xe8] sm:$0xff]
    %v94 = vld [vmem:[#allocation5 + $0xf0] sm:$0xff]
    %v95 = vld [vmem:[#allocation5 + $0xf8] sm:$0xff]
    %v96 = vld [vmem:[#allocation5 + $0x100] sm:$0xff]
    %v97 = vld [vmem:[#allocation5 + $0x108] sm:$0xff]
    %v98 = vld [vmem:[#allocation5 + $0x110] sm:$0xff]
    %v99 = vld [vmem:[#allocation5 + $0x118] sm:$0xff]
    %v100 = vld [vmem:[#allocation5 + $0x120] sm:$0xff]
    %v101 = vld [vmem:[#allocation5 + $0x128] sm:$0xff]
    %v102 = vld [vmem:[#allocation5 + $0x130] sm:$0xff]
    %v103 = vld [vmem:[#allocation5 + $0x138] sm:$0xff]
    %v104 = vld [vmem:[#allocation7] sm:$0xff]
    %v105 = vld [vmem:[#allocation7 + $0x8] sm:$0xff]
    %v106 = vld [vmem:[#allocation7 + $0x10] sm:$0xff]
    %v107 = vld [vmem:[#allocation7 + $0x18] sm:$0xff]
    %v108 = vld [vmem:[#allocation7 + $0x20] sm:$0xff]
    %v109 = vld [vmem:[#allocation7 + $0x28] sm:$0xff]
    %v110 = vld [vmem:[#allocation7 + $0x30] sm:$0xff]
    %v111 = vld [vmem:[#allocation7 + $0x38] sm:$0xff]
    %v112 = vld [vmem:[#allocation7 + $0x40] sm:$0xff]
    %v113 = vld [vmem:[#allocation7 + $0x48] sm:$0xff]
    %v114 = vld [vmem:[#allocation7 + $0x50] sm:$0xff]
    %v115 = vld [vmem:[#allocation7 + $0x58] sm:$0xff]
    %v116 = vld [vmem:[#allocation7 + $0x60] sm:$0xff]
    %v117 = vld [vmem:[#allocation7 + $0x68] sm:$0xff]
    %v118 = vld [vmem:[#allocation7 + $0x70] sm:$0xff]
    %v119 = vld [vmem:[#allocation7 + $0x78] sm:$0xff]
    %v120 = vld [vmem:[#allocation7 + $0x80] sm:$0xff]
    %v121 = vld [vmem:[#allocation7 + $0x88] sm:$0xff]
    %v122 = vld [vmem:[#allocation7 + $0x90] sm:$0xff]
    %v123 = vld [vmem:[#allocation7 + $0x98] sm:$0xff]
    %v124 = vld [vmem:[#allocation7 + $0xa0] sm:$0xff]
    %v125 = vld [vmem:[#allocation7 + $0xa8] sm:$0xff]
    %v126 = vld [vmem:[#allocation7 + $0xb0] sm:$0xff]
    %v127 = vld [vmem:[#allocation7 + $0xb8] sm:$0xff]
    %v128 = vld [vmem:[#allocation7 + $0xc0] sm:$0xff]
    %v129 = vld [vmem:[#allocation7 + $0xc8] sm:$0xff]
    %v130 = vld [vmem:[#allocation7 + $0xd0] sm:$0xff]
    %v131 = vld [vmem:[#allocation7 + $0xd8] sm:$0xff]
    %v132 = vld [vmem:[#allocation7 + $0xe0] sm:$0xff]
    %v133 = vld [vmem:[#allocation7 + $0xe8] sm:$0xff]
    %v134 = vld [vmem:[#allocation7 + $0xf0] sm:$0xff]
    %v135 = vld [vmem:[#allocation7 + $0xf8] sm:$0xff]
    %v136 = vld [vmem:[#allocation7 + $0x100] sm:$0xff]
    %v137 = vld [vmem:[#allocation7 + $0x108] sm:$0xff]
    %v138 = vld [vmem:[#allocation7 + $0x110] sm:$0xff]
    %v139 = vld [vmem:[#allocation7 + $0x118] sm:$0xff]
    %v140 = vld [vmem:[#allocation7 + $0x120] sm:$0xff]
    %v141 = vld [vmem:[#allocation7 + $0x128] sm:$0xff]
    %v142 = vld [vmem:[#allocation7 + $0x130] sm:$0xff]
    %v143 = vld [vmem:[#allocation7 + $0x138] sm:$0xff]
    %v152 = vcombine.low %v56, %v57
    %v153 = vcombine.low %v58, %v59
    %v154 = vcombine.low %v60, %v61
    %v155 = vcombine.low %v62, %v63
    %v157 = vunpack.c.l.s4 1966171168
    %v158 = vunpack.c.0.s8 %v157
    %v159 = vlaneseq
    %v160 = vshrl.u32 %v159, 7
    %v161 = vsub.s32 %v158, %v160
    %v162 = vrot.slane %v152, %v161
    %v164 = vunpack.c.l.s4 1966171168
    %v165 = vunpack.c.0.s8 %v164
    %v166 = vlaneseq
    %v167 = vshrl.u32 %v166, 7
    %v168 = vsub.s32 %v165, %v167
    %v169 = vrot.slane %v153, %v168
    %v171 = vunpack.c.l.s4 1966171168
    %v172 = vunpack.c.0.s8 %v171
    %v173 = vlaneseq
    %v174 = vshrl.u32 %v173, 7
    %v175 = vsub.s32 %v172, %v174
    %v176 = vrot.slane %v154, %v175
    %v178 = vunpack.c.l.s4 1966171168
    %v179 = vunpack.c.0.s8 %v178
    %v180 = vlaneseq
    %v181 = vshrl.u32 %v180, 7
    %v182 = vsub.s32 %v179, %v181
    %v183 = vrot.slane %v155, %v182
    %v184 = vcombine.low %v162, %v169
    %v185 = vcombine.low %v176, %v183
    %v187 = vunpack.c.l.s4 1966171168
    %v188 = vunpack.c.0.s8 %v187
    %v189 = vlaneseq
    %v190 = vshrl.u32 %v189, 7
    %v191 = vsub.s32 %v188, %v190
    %v192 = vrot.slane %v184, %v191
    %v194 = vunpack.c.l.s4 1966171168
    %v195 = vunpack.c.0.s8 %v194
    %v196 = vlaneseq
    %v197 = vshrl.u32 %v196, 7
    %v198 = vsub.s32 %v195, %v197
    %v199 = vrot.slane %v185, %v198
    %v200 = vcombine.low %v192, %v199
    %202 = vmatprep.subr.mxu0 0.0
    %v203 = vand.u32 %v64, 4294901760
    %204 = vmatpush1.xpose.msra.mxu0 %v203
    %205 = vmatprep.subr.mxu0 0.0
    %v206 = vand.u32 %v65, 4294901760
    %207 = vmatpush1.xpose.msra.mxu0 %v206
    %208 = vmatprep.subr.mxu0 0.0
    %v209 = vand.u32 %v66, 4294901760
    %210 = vmatpush1.xpose.msra.mxu0 %v209
    %211 = vmatprep.subr.mxu0 0.0
    %v212 = vand.u32 %v67, 4294901760
    %213 = vmatpush1.xpose.msra.mxu0 %v212
    %214 = vmatprep.subr.mxu0 0.0
    %v215 = vand.u32 %v68, 4294901760
    %216 = vmatpush1.xpose.msra.mxu0 %v215
    %217 = vmatprep.subr.mxu0 0.0
    %v218 = vand.u32 %v69, 4294901760
    %219 = vmatpush1.xpose.msra.mxu0 %v218
    %220 = vmatprep.subr.mxu0 0.0
    %v221 = vand.u32 %v70, 4294901760
    %222 = vmatpush1.xpose.msra.mxu0 %v221
    %223 = vmatprep.subr.mxu0 0.0
    %v224 = vand.u32 %v71, 4294901760
    %225 = vmatpush1.xpose.msra.mxu0 %v224
    %226 = vmatprep.subr.mxu0 0.0
    %v227 = vand.u32 %v72, 4294901760
    %228 = vmatpush1.xpose.msra.mxu0 %v227
    %229 = vmatprep.subr.mxu0 0.0
    %v230 = vand.u32 %v73, 4294901760
    %231 = vmatpush1.xpose.msra.mxu0 %v230
    %232 = vmatprep.subr.mxu0 0.0
    %v233 = vand.u32 %v74, 4294901760
    %234 = vmatpush1.xpose.msra.mxu0 %v233
    %235 = vmatprep.subr.mxu0 0.0
    %v236 = vand.u32 %v75, 4294901760
    %237 = vmatpush1.xpose.msra.mxu0 %v236
    %238 = vmatprep.subr.mxu0 0.0
    %v239 = vand.u32 %v76, 4294901760
    %240 = vmatpush1.xpose.msra.mxu0 %v239
    %241 = vmatprep.subr.mxu0 0.0
    %v242 = vand.u32 %v77, 4294901760
    %243 = vmatpush1.xpose.msra.mxu0 %v242
    %244 = vmatprep.subr.mxu0 0.0
    %v245 = vand.u32 %v78, 4294901760
    %246 = vmatpush1.xpose.msra.mxu0 %v245
    %247 = vmatprep.subr.mxu0 0.0
    %v248 = vand.u32 %v79, 4294901760
    %249 = vmatpush1.xpose.msra.mxu0 %v248
    %250 = vmatprep.subr.mxu0 0.0
    %v251 = vand.u32 %v80, 4294901760
    %252 = vmatpush1.xpose.msra.mxu0 %v251
    %253 = vmatprep.subr.mxu0 0.0
    %v254 = vand.u32 %v81, 4294901760
    %255 = vmatpush1.xpose.msra.mxu0 %v254
    %256 = vmatprep.subr.mxu0 0.0
    %v257 = vand.u32 %v82, 4294901760
    %258 = vmatpush1.xpose.msra.mxu0 %v257
    %259 = vmatprep.subr.mxu0 0.0
    %v260 = vand.u32 %v83, 4294901760
    %261 = vmatpush1.xpose.msra.mxu0 %v260
    %262 = vmatprep.subr.mxu0 0.0
    %v263 = vand.u32 %v84, 4294901760
    %264 = vmatpush1.xpose.msra.mxu0 %v263
    %265 = vmatprep.subr.mxu0 0.0
    %v266 = vand.u32 %v85, 4294901760
    %267 = vmatpush1.xpose.msra.mxu0 %v266
    %268 = vmatprep.subr.mxu0 0.0
    %v269 = vand.u32 %v86, 4294901760
    %270 = vmatpush1.xpose.msra.mxu0 %v269
    %271 = vmatprep.subr.mxu0 0.0
    %v272 = vand.u32 %v87, 4294901760
    %273 = vmatpush1.xpose.msra.mxu0 %v272
    %274 = vmatprep.subr.mxu0 0.0
    %v275 = vand.u32 %v88, 4294901760
    %276 = vmatpush1.xpose.msra.mxu0 %v275
    %277 = vmatprep.subr.mxu0 0.0
    %v278 = vand.u32 %v89, 4294901760
    %279 = vmatpush1.xpose.msra.mxu0 %v278
    %280 = vmatprep.subr.mxu0 0.0
    %v281 = vand.u32 %v90, 4294901760
    %282 = vmatpush1.xpose.msra.mxu0 %v281
    %283 = vmatprep.subr.mxu0 0.0
    %v284 = vand.u32 %v91, 4294901760
    %285 = vmatpush1.xpose.msra.mxu0 %v284
    %286 = vmatprep.subr.mxu0 0.0
    %v287 = vand.u32 %v92, 4294901760
    %288 = vmatpush1.xpose.msra.mxu0 %v287
    %289 = vmatprep.subr.mxu0 0.0
    %v290 = vand.u32 %v93, 4294901760
    %291 = vmatpush1.xpose.msra.mxu0 %v290
    %292 = vmatprep.subr.mxu0 0.0
    %v293 = vand.u32 %v94, 4294901760
    %294 = vmatpush1.xpose.msra.mxu0 %v293
    %295 = vmatprep.subr.mxu0 0.0
    %v296 = vand.u32 %v95, 4294901760
    %297 = vmatpush1.xpose.msra.mxu0 %v296
    %298 = vmatprep.mubr.f32.mxu0 0.0
    %v299 = vand.u32 %v200, 4294901760
    %v300 = vsub.f32 %v200, %v299
    %v301 = vand.u32 %v300, 4294901760
    %v302 = vsub.f32 %v300, %v301
    %v303 = vand.u32 %v302, 4294901760
    %304 = vmatmul.mubr.f32.gmra.mrb[0].mxu0 %v303
    %v305 = vpop.f32.mrb[0].mxu0
    %v306 = vadd.f32 0.0, %v305
    %v307 = vpop.f32.mrb[0].mxu0
    %v308 = vadd.f32 0.0, %v307
    %309 = vdwg.mxu0
    %310 = vmatprep.subr.mxu0 0.0
    %v311 = vand.u32 %v64, 4294901760
    %v312 = vsub.f32 %v64, %v311
    %v313 = vand.u32 %v312, 4294901760
    %v314 = vsub.f32 %v312, %v313
    %v315 = vand.u32 %v314, 4294901760
    %316 = vmatpush1.xpose.msra.mxu0 %v315
    %317 = vmatprep.subr.mxu0 0.0
    %v318 = vand.u32 %v65, 4294901760
    %v319 = vsub.f32 %v65, %v318
    %v320 = vand.u32 %v319, 4294901760
    %v321 = vsub.f32 %v319, %v320
    %v322 = vand.u32 %v321, 4294901760
    %323 = vmatpush1.xpose.msra.mxu0 %v322
    %324 = vmatprep.subr.mxu0 0.0
    %v325 = vand.u32 %v66, 4294901760
    %v326 = vsub.f32 %v66, %v325
    %v327 = vand.u32 %v326, 4294901760
    %v328 = vsub.f32 %v326, %v327
    %v329 = vand.u32 %v328, 4294901760
    %330 = vmatpush1.xpose.msra.mxu0 %v329
    %331 = vmatprep.subr.mxu0 0.0
    %v332 = vand.u32 %v67, 4294901760
    %v333 = vsub.f32 %v67, %v332
    %v334 = vand.u32 %v333, 4294901760
    %v335 = vsub.f32 %v333, %v334
    %v336 = vand.u32 %v335, 4294901760
    %337 = vmatpush1.xpose.msra.mxu0 %v336
    %338 = vmatprep.subr.mxu0 0.0
    %v339 = vand.u32 %v68, 4294901760
    %v340 = vsub.f32 %v68, %v339
    %v341 = vand.u32 %v340, 4294901760
    %v342 = vsub.f32 %v340, %v341
    %v343 = vand.u32 %v342, 4294901760
    %344 = vmatpush1.xpose.msra.mxu0 %v343
    %345 = vmatprep.subr.mxu0 0.0
    %v346 = vand.u32 %v69, 4294901760
    %v347 = vsub.f32 %v69, %v346
    %v348 = vand.u32 %v347, 4294901760
    %v349 = vsub.f32 %v347, %v348
    %v350 = vand.u32 %v349, 4294901760
    %351 = vmatpush1.xpose.msra.mxu0 %v350
    %352 = vmatprep.subr.mxu0 0.0
    %v353 = vand.u32 %v70, 4294901760
    %v354 = vsub.f32 %v70, %v353
    %v355 = vand.u32 %v354, 4294901760
    %v356 = vsub.f32 %v354, %v355
    %v357 = vand.u32 %v356, 4294901760
    %358 = vmatpush1.xpose.msra.mxu0 %v357
    %359 = vmatprep.subr.mxu0 0.0
    %v360 = vand.u32 %v71, 4294901760
    %v361 = vsub.f32 %v71, %v360
    %v362 = vand.u32 %v361, 4294901760
    %v363 = vsub.f32 %v361, %v362
    %v364 = vand.u32 %v363, 4294901760
    %365 = vmatpush1.xpose.msra.mxu0 %v364
    %366 = vmatprep.subr.mxu0 0.0
    %v367 = vand.u32 %v72, 4294901760
    %v368 = vsub.f32 %v72, %v367
    %v369 = vand.u32 %v368, 4294901760
    %v370 = vsub.f32 %v368, %v369
    %v371 = vand.u32 %v370, 4294901760
    %372 = vmatpush1.xpose.msra.mxu0 %v371
    %373 = vmatprep.subr.mxu0 0.0
    %v374 = vand.u32 %v73, 4294901760
    %v375 = vsub.f32 %v73, %v374
    %v376 = vand.u32 %v375, 4294901760
    %v377 = vsub.f32 %v375, %v376
    %v378 = vand.u32 %v377, 4294901760
    %379 = vmatpush1.xpose.msra.mxu0 %v378
    %380 = vmatprep.subr.mxu0 0.0
    %v381 = vand.u32 %v74, 4294901760
    %v382 = vsub.f32 %v74, %v381
    %v383 = vand.u32 %v382, 4294901760
    %v384 = vsub.f32 %v382, %v383
    %v385 = vand.u32 %v384, 4294901760
    %386 = vmatpush1.xpose.msra.mxu0 %v385
    %387 = vmatprep.subr.mxu0 0.0
    %v388 = vand.u32 %v75, 4294901760
    %v389 = vsub.f32 %v75, %v388
    %v390 = vand.u32 %v389, 4294901760
    %v391 = vsub.f32 %v389, %v390
    %v392 = vand.u32 %v391, 4294901760
    %393 = vmatpush1.xpose.msra.mxu0 %v392
    %394 = vmatprep.subr.mxu0 0.0
    %v395 = vand.u32 %v76, 4294901760
    %v396 = vsub.f32 %v76, %v395
    %v397 = vand.u32 %v396, 4294901760
    %v398 = vsub.f32 %v396, %v397
    %v399 = vand.u32 %v398, 4294901760
    %400 = vmatpush1.xpose.msra.mxu0 %v399
    %401 = vmatprep.subr.mxu0 0.0
    %v402 = vand.u32 %v77, 4294901760
    %v403 = vsub.f32 %v77, %v402
    %v404 = vand.u32 %v403, 4294901760
    %v405 = vsub.f32 %v403, %v404
    %v406 = vand.u32 %v405, 4294901760
    %407 = vmatpush1.xpose.msra.mxu0 %v406
    %408 = vmatprep.subr.mxu0 0.0
    %v409 = vand.u32 %v78, 4294901760
    %v410 = vsub.f32 %v78, %v409
    %v411 = vand.u32 %v410, 4294901760
    %v412 = vsub.f32 %v410, %v411
    %v413 = vand.u32 %v412, 4294901760
    %414 = vmatpush1.xpose.msra.mxu0 %v413
    %415 = vmatprep.subr.mxu0 0.0
    %v416 = vand.u32 %v79, 4294901760
    %v417 = vsub.f32 %v79, %v416
    %v418 = vand.u32 %v417, 4294901760
    %v419 = vsub.f32 %v417, %v418
    %v420 = vand.u32 %v419, 4294901760
    %421 = vmatpush1.xpose.msra.mxu0 %v420
    %422 = vmatprep.subr.mxu0 0.0
    %v423 = vand.u32 %v80, 4294901760
    %v424 = vsub.f32 %v80, %v423
    %v425 = vand.u32 %v424, 4294901760
    %v426 = vsub.f32 %v424, %v425
    %v427 = vand.u32 %v426, 4294901760
    %428 = vmatpush1.xpose.msra.mxu0 %v427
    %429 = vmatprep.subr.mxu0 0.0
    %v430 = vand.u32 %v81, 4294901760
    %v431 = vsub.f32 %v81, %v430
    %v432 = vand.u32 %v431, 4294901760
    %v433 = vsub.f32 %v431, %v432
    %v434 = vand.u32 %v433, 4294901760
    %435 = vmatpush1.xpose.msra.mxu0 %v434
    %436 = vmatprep.subr.mxu0 0.0
    %v437 = vand.u32 %v82, 4294901760
    %v438 = vsub.f32 %v82, %v437
    %v439 = vand.u32 %v438, 4294901760
    %v440 = vsub.f32 %v438, %v439
    %v441 = vand.u32 %v440, 4294901760
    %442 = vmatpush1.xpose.msra.mxu0 %v441
    %443 = vmatprep.subr.mxu0 0.0
    %v444 = vand.u32 %v83, 4294901760
    %v445 = vsub.f32 %v83, %v444
    %v446 = vand.u32 %v445, 4294901760
    %v447 = vsub.f32 %v445, %v446
    %v448 = vand.u32 %v447, 4294901760
    %449 = vmatpush1.xpose.msra.mxu0 %v448
    %450 = vmatprep.subr.mxu0 0.0
    %v451 = vand.u32 %v84, 4294901760
    %v452 = vsub.f32 %v84, %v451
    %v453 = vand.u32 %v452, 4294901760
    %v454 = vsub.f32 %v452, %v453
    %v455 = vand.u32 %v454, 4294901760
    %456 = vmatpush1.xpose.msra.mxu0 %v455
    %457 = vmatprep.subr.mxu0 0.0
    %v458 = vand.u32 %v85, 4294901760
    %v459 = vsub.f32 %v85, %v458
    %v460 = vand.u32 %v459, 4294901760
    %v461 = vsub.f32 %v459, %v460
    %v462 = vand.u32 %v461, 4294901760
    %463 = vmatpush1.xpose.msra.mxu0 %v462
    %464 = vmatprep.subr.mxu0 0.0
    %v465 = vand.u32 %v86, 4294901760
    %v466 = vsub.f32 %v86, %v465
    %v467 = vand.u32 %v466, 4294901760
    %v468 = vsub.f32 %v466, %v467
    %v469 = vand.u32 %v468, 4294901760
    %470 = vmatpush1.xpose.msra.mxu0 %v469
    %471 = vmatprep.subr.mxu0 0.0
    %v472 = vand.u32 %v87, 4294901760
    %v473 = vsub.f32 %v87, %v472
    %v474 = vand.u32 %v473, 4294901760
    %v475 = vsub.f32 %v473, %v474
    %v476 = vand.u32 %v475, 4294901760
    %477 = vmatpush1.xpose.msra.mxu0 %v476
    %478 = vmatprep.subr.mxu0 0.0
    %v479 = vand.u32 %v88, 4294901760
    %v480 = vsub.f32 %v88, %v479
    %v481 = vand.u32 %v480, 4294901760
    %v482 = vsub.f32 %v480, %v481
    %v483 = vand.u32 %v482, 4294901760
    %484 = vmatpush1.xpose.msra.mxu0 %v483
    %485 = vmatprep.subr.mxu0 0.0
    %v486 = vand.u32 %v89, 4294901760
    %v487 = vsub.f32 %v89, %v486
    %v488 = vand.u32 %v487, 4294901760
    %v489 = vsub.f32 %v487, %v488
    %v490 = vand.u32 %v489, 4294901760
    %491 = vmatpush1.xpose.msra.mxu0 %v490
    %492 = vmatprep.subr.mxu0 0.0
    %v493 = vand.u32 %v90, 4294901760
    %v494 = vsub.f32 %v90, %v493
    %v495 = vand.u32 %v494, 4294901760
    %v496 = vsub.f32 %v494, %v495
    %v497 = vand.u32 %v496, 4294901760
    %498 = vmatpush1.xpose.msra.mxu0 %v497
    %499 = vmatprep.subr.mxu0 0.0
    %v500 = vand.u32 %v91, 4294901760
    %v501 = vsub.f32 %v91, %v500
    %v502 = vand.u32 %v501, 4294901760
    %v503 = vsub.f32 %v501, %v502
    %v504 = vand.u32 %v503, 4294901760
    %505 = vmatpush1.xpose.msra.mxu0 %v504
    %506 = vmatprep.subr.mxu0 0.0
    %v507 = vand.u32 %v92, 4294901760
    %v508 = vsub.f32 %v92, %v507
    %v509 = vand.u32 %v508, 4294901760
    %v510 = vsub.f32 %v508, %v509
    %v511 = vand.u32 %v510, 4294901760
    %512 = vmatpush1.xpose.msra.mxu0 %v511
    %513 = vmatprep.subr.mxu0 0.0
    %v514 = vand.u32 %v93, 4294901760
    %v515 = vsub.f32 %v93, %v514
    %v516 = vand.u32 %v515, 4294901760
    %v517 = vsub.f32 %v515, %v516
    %v518 = vand.u32 %v517, 4294901760
    %519 = vmatpush1.xpose.msra.mxu0 %v518
    %520 = vmatprep.subr.mxu0 0.0
    %v521 = vand.u32 %v94, 4294901760
    %v522 = vsub.f32 %v94, %v521
    %v523 = vand.u32 %v522, 4294901760
    %v524 = vsub.f32 %v522, %v523
    %v525 = vand.u32 %v524, 4294901760
    %526 = vmatpush1.xpose.msra.mxu0 %v525
    %527 = vmatprep.subr.mxu0 0.0
    %v528 = vand.u32 %v95, 4294901760
    %v529 = vsub.f32 %v95, %v528
    %v530 = vand.u32 %v529, 4294901760
    %v531 = vsub.f32 %v529, %v530
    %v532 = vand.u32 %v531, 4294901760
    %533 = vmatpush1.xpose.msra.mxu0 %v532
    %534 = vmatprep.mubr.f32.mxu0 0.0
    %v535 = vand.u32 %v200, 4294901760
    %536 = vmatmul.mubr.f32.gmra.mrb[0].mxu0 %v535
    %v537 = vpop.f32.mrb[0].mxu0
    %v538 = vadd.f32 %v306, %v537
    %v539 = vpop.f32.mrb[0].mxu0
    %v540 = vadd.f32 %v308, %v539
    %541 = vdwg.mxu0
    %542 = vmatprep.subr.mxu0 0.0
    %v543 = vand.u32 %v64, 4294901760
    %v544 = vsub.f32 %v64, %v543
    %545 = vmatpush1.xpose.msra.mxu0 %v544
    %546 = vmatprep.subr.mxu0 0.0
    %v547 = vand.u32 %v65, 4294901760
    %v548 = vsub.f32 %v65, %v547
    %549 = vmatpush1.xpose.msra.mxu0 %v548
    %550 = vmatprep.subr.mxu0 0.0
    %v551 = vand.u32 %v66, 4294901760
    %v552 = vsub.f32 %v66, %v551
    %553 = vmatpush1.xpose.msra.mxu0 %v552
    %554 = vmatprep.subr.mxu0 0.0
    %v555 = vand.u32 %v67, 4294901760
    %v556 = vsub.f32 %v67, %v555
    %557 = vmatpush1.xpose.msra.mxu0 %v556
    %558 = vmatprep.subr.mxu0 0.0
    %v559 = vand.u32 %v68, 4294901760
    %v560 = vsub.f32 %v68, %v559
    %561 = vmatpush1.xpose.msra.mxu0 %v560
    %562 = vmatprep.subr.mxu0 0.0
    %v563 = vand.u32 %v69, 4294901760
    %v564 = vsub.f32 %v69, %v563
    %565 = vmatpush1.xpose.msra.mxu0 %v564
    %566 = vmatprep.subr.mxu0 0.0
    %v567 = vand.u32 %v70, 4294901760
    %v568 = vsub.f32 %v70, %v567
    %569 = vmatpush1.xpose.msra.mxu0 %v568
    %570 = vmatprep.subr.mxu0 0.0
    %v571 = vand.u32 %v71, 4294901760
    %v572 = vsub.f32 %v71, %v571
    %573 = vmatpush1.xpose.msra.mxu0 %v572
    %574 = vmatprep.subr.mxu0 0.0
    %v575 = vand.u32 %v72, 4294901760
    %v576 = vsub.f32 %v72, %v575
    %577 = vmatpush1.xpose.msra.mxu0 %v576
    %578 = vmatprep.subr.mxu0 0.0
    %v579 = vand.u32 %v73, 4294901760
    %v580 = vsub.f32 %v73, %v579
    %581 = vmatpush1.xpose.msra.mxu0 %v580
    %582 = vmatprep.subr.mxu0 0.0
    %v583 = vand.u32 %v74, 4294901760
    %v584 = vsub.f32 %v74, %v583
    %585 = vmatpush1.xpose.msra.mxu0 %v584
    %586 = vmatprep.subr.mxu0 0.0
    %v587 = vand.u32 %v75, 4294901760
    %v588 = vsub.f32 %v75, %v587
    %589 = vmatpush1.xpose.msra.mxu0 %v588
    %590 = vmatprep.subr.mxu0 0.0
    %v591 = vand.u32 %v76, 4294901760
    %v592 = vsub.f32 %v76, %v591
    %593 = vmatpush1.xpose.msra.mxu0 %v592
    %594 = vmatprep.subr.mxu0 0.0
    %v595 = vand.u32 %v77, 4294901760
    %v596 = vsub.f32 %v77, %v595
    %597 = vmatpush1.xpose.msra.mxu0 %v596
    %598 = vmatprep.subr.mxu0 0.0
    %v599 = vand.u32 %v78, 4294901760
    %v600 = vsub.f32 %v78, %v599
    %601 = vmatpush1.xpose.msra.mxu0 %v600
    %602 = vmatprep.subr.mxu0 0.0
    %v603 = vand.u32 %v79, 4294901760
    %v604 = vsub.f32 %v79, %v603
    %605 = vmatpush1.xpose.msra.mxu0 %v604
    %606 = vmatprep.subr.mxu0 0.0
    %v607 = vand.u32 %v80, 4294901760
    %v608 = vsub.f32 %v80, %v607
    %609 = vmatpush1.xpose.msra.mxu0 %v608
    %610 = vmatprep.subr.mxu0 0.0
    %v611 = vand.u32 %v81, 4294901760
    %v612 = vsub.f32 %v81, %v611
    %613 = vmatpush1.xpose.msra.mxu0 %v612
    %614 = vmatprep.subr.mxu0 0.0
    %v615 = vand.u32 %v82, 4294901760
    %v616 = vsub.f32 %v82, %v615
    %617 = vmatpush1.xpose.msra.mxu0 %v616
    %618 = vmatprep.subr.mxu0 0.0
    %v619 = vand.u32 %v83, 4294901760
    %v620 = vsub.f32 %v83, %v619
    %621 = vmatpush1.xpose.msra.mxu0 %v620
    %622 = vmatprep.subr.mxu0 0.0
    %v623 = vand.u32 %v84, 4294901760
    %v624 = vsub.f32 %v84, %v623
    %625 = vmatpush1.xpose.msra.mxu0 %v624
    %626 = vmatprep.subr.mxu0 0.0
    %v627 = vand.u32 %v85, 4294901760
    %v628 = vsub.f32 %v85, %v627
    %629 = vmatpush1.xpose.msra.mxu0 %v628
    %630 = vmatprep.subr.mxu0 0.0
    %v631 = vand.u32 %v86, 4294901760
    %v632 = vsub.f32 %v86, %v631
    %633 = vmatpush1.xpose.msra.mxu0 %v632
    %634 = vmatprep.subr.mxu0 0.0
    %v635 = vand.u32 %v87, 4294901760
    %v636 = vsub.f32 %v87, %v635
    %637 = vmatpush1.xpose.msra.mxu0 %v636
    %638 = vmatprep.subr.mxu0 0.0
    %v639 = vand.u32 %v88, 4294901760
    %v640 = vsub.f32 %v88, %v639
    %641 = vmatpush1.xpose.msra.mxu0 %v640
    %642 = vmatprep.subr.mxu0 0.0
    %v643 = vand.u32 %v89, 4294901760
    %v644 = vsub.f32 %v89, %v643
    %645 = vmatpush1.xpose.msra.mxu0 %v644
    %646 = vmatprep.subr.mxu0 0.0
    %v647 = vand.u32 %v90, 4294901760
    %v648 = vsub.f32 %v90, %v647
    %649 = vmatpush1.xpose.msra.mxu0 %v648
    %650 = vmatprep.subr.mxu0 0.0
    %v651 = vand.u32 %v91, 4294901760
    %v652 = vsub.f32 %v91, %v651
    %653 = vmatpush1.xpose.msra.mxu0 %v652
    %654 = vmatprep.subr.mxu0 0.0
    %v655 = vand.u32 %v92, 4294901760
    %v656 = vsub.f32 %v92, %v655
    %657 = vmatpush1.xpose.msra.mxu0 %v656
    %658 = vmatprep.subr.mxu0 0.0
    %v659 = vand.u32 %v93, 4294901760
    %v660 = vsub.f32 %v93, %v659
    %661 = vmatpush1.xpose.msra.mxu0 %v660
    %662 = vmatprep.subr.mxu0 0.0
    %v663 = vand.u32 %v94, 4294901760
    %v664 = vsub.f32 %v94, %v663
    %665 = vmatpush1.xpose.msra.mxu0 %v664
    %666 = vmatprep.subr.mxu0 0.0
    %v667 = vand.u32 %v95, 4294901760
    %v668 = vsub.f32 %v95, %v667
    %669 = vmatpush1.xpose.msra.mxu0 %v668
    %670 = vmatprep.mubr.f32.mxu0 0.0
    %v671 = vand.u32 %v200, 4294901760
    %v672 = vsub.f32 %v200, %v671
    %673 = vmatmul.mubr.f32.gmra.mrb[0].mxu0 %v672
    %v674 = vpop.f32.mrb[0].mxu0
    %v675 = vadd.f32 %v538, %v674
    %v676 = vpop.f32.mrb[0].mxu0
    %v677 = vadd.f32 %v540, %v676
    %678 = vdwg.mxu0
    %679 = vmatprep.subr.mxu0 0.0
    %v680 = vand.u32 %v64, 4294901760
    %681 = vmatpush1.xpose.msra.mxu0 %v680
    %682 = vmatprep.subr.mxu0 0.0
    %v683 = vand.u32 %v65, 4294901760
    %684 = vmatpush1.xpose.msra.mxu0 %v683
    %685 = vmatprep.subr.mxu0 0.0
    %v686 = vand.u32 %v66, 4294901760
    %687 = vmatpush1.xpose.msra.mxu0 %v686
    %688 = vmatprep.subr.mxu0 0.0
    %v689 = vand.u32 %v67, 4294901760
    %690 = vmatpush1.xpose.msra.mxu0 %v689
    %691 = vmatprep.subr.mxu0 0.0
    %v692 = vand.u32 %v68, 4294901760
    %693 = vmatpush1.xpose.msra.mxu0 %v692
    %694 = vmatprep.subr.mxu0 0.0
    %v695 = vand.u32 %v69, 4294901760
    %696 = vmatpush1.xpose.msra.mxu0 %v695
    %697 = vmatprep.subr.mxu0 0.0
    %v698 = vand.u32 %v70, 4294901760
    %699 = vmatpush1.xpose.msra.mxu0 %v698
    %700 = vmatprep.subr.mxu0 0.0
    %v701 = vand.u32 %v71, 4294901760
    %702 = vmatpush1.xpose.msra.mxu0 %v701
    %703 = vmatprep.subr.mxu0 0.0
    %v704 = vand.u32 %v72, 4294901760
    %705 = vmatpush1.xpose.msra.mxu0 %v704
    %706 = vmatprep.subr.mxu0 0.0
    %v707 = vand.u32 %v73, 4294901760
    %708 = vmatpush1.xpose.msra.mxu0 %v707
    %709 = vmatprep.subr.mxu0 0.0
    %v710 = vand.u32 %v74, 4294901760
    %711 = vmatpush1.xpose.msra.mxu0 %v710
    %712 = vmatprep.subr.mxu0 0.0
    %v713 = vand.u32 %v75, 4294901760
    %714 = vmatpush1.xpose.msra.mxu0 %v713
    %715 = vmatprep.subr.mxu0 0.0
    %v716 = vand.u32 %v76, 4294901760
    %717 = vmatpush1.xpose.msra.mxu0 %v716
    %718 = vmatprep.subr.mxu0 0.0
    %v719 = vand.u32 %v77, 4294901760
    %720 = vmatpush1.xpose.msra.mxu0 %v719
    %721 = vmatprep.subr.mxu0 0.0
    %v722 = vand.u32 %v78, 4294901760
    %723 = vmatpush1.xpose.msra.mxu0 %v722
    %724 = vmatprep.subr.mxu0 0.0
    %v725 = vand.u32 %v79, 4294901760
    %726 = vmatpush1.xpose.msra.mxu0 %v725
    %727 = vmatprep.subr.mxu0 0.0
    %v728 = vand.u32 %v80, 4294901760
    %729 = vmatpush1.xpose.msra.mxu0 %v728
    %730 = vmatprep.subr.mxu0 0.0
    %v731 = vand.u32 %v81, 4294901760
    %732 = vmatpush1.xpose.msra.mxu0 %v731
    %733 = vmatprep.subr.mxu0 0.0
    %v734 = vand.u32 %v82, 4294901760
    %735 = vmatpush1.xpose.msra.mxu0 %v734
    %736 = vmatprep.subr.mxu0 0.0
    %v737 = vand.u32 %v83, 4294901760
    %738 = vmatpush1.xpose.msra.mxu0 %v737
    %739 = vmatprep.subr.mxu0 0.0
    %v740 = vand.u32 %v84, 4294901760
    %741 = vmatpush1.xpose.msra.mxu0 %v740
    %742 = vmatprep.subr.mxu0 0.0
    %v743 = vand.u32 %v85, 4294901760
    %744 = vmatpush1.xpose.msra.mxu0 %v743
    %745 = vmatprep.subr.mxu0 0.0
    %v746 = vand.u32 %v86, 4294901760
    %747 = vmatpush1.xpose.msra.mxu0 %v746
    %748 = vmatprep.subr.mxu0 0.0
    %v749 = vand.u32 %v87, 4294901760
    %750 = vmatpush1.xpose.msra.mxu0 %v749
    %751 = vmatprep.subr.mxu0 0.0
    %v752 = vand.u32 %v88, 4294901760
    %753 = vmatpush1.xpose.msra.mxu0 %v752
    %754 = vmatprep.subr.mxu0 0.0
    %v755 = vand.u32 %v89, 4294901760
    %756 = vmatpush1.xpose.msra.mxu0 %v755
    %757 = vmatprep.subr.mxu0 0.0
    %v758 = vand.u32 %v90, 4294901760
    %759 = vmatpush1.xpose.msra.mxu0 %v758
    %760 = vmatprep.subr.mxu0 0.0
    %v761 = vand.u32 %v91, 4294901760
    %762 = vmatpush1.xpose.msra.mxu0 %v761
    %763 = vmatprep.subr.mxu0 0.0
    %v764 = vand.u32 %v92, 4294901760
    %765 = vmatpush1.xpose.msra.mxu0 %v764
    %766 = vmatprep.subr.mxu0 0.0
    %v767 = vand.u32 %v93, 4294901760
    %768 = vmatpush1.xpose.msra.mxu0 %v767
    %769 = vmatprep.subr.mxu0 0.0
    %v770 = vand.u32 %v94, 4294901760
    %771 = vmatpush1.xpose.msra.mxu0 %v770
    %772 = vmatprep.subr.mxu0 0.0
    %v773 = vand.u32 %v95, 4294901760
    %774 = vmatpush1.xpose.msra.mxu0 %v773
    %775 = vmatprep.mubr.f32.mxu0 0.0
    %v776 = vand.u32 %v200, 4294901760
    %v777 = vsub.f32 %v200, %v776
    %v778 = vand.u32 %v777, 4294901760
    %779 = vmatmul.mubr.f32.gmra.mrb[0].mxu0 %v778
    %v780 = vpop.f32.mrb[0].mxu0
    %v781 = vadd.f32 %v675, %v780
    %v782 = vpop.f32.mrb[0].mxu0
    %v783 = vadd.f32 %v677, %v782
    %784 = vdwg.mxu0
    %785 = vmatprep.subr.mxu0 0.0
    %v786 = vand.u32 %v64, 4294901760
    %v787 = vsub.f32 %v64, %v786
    %v788 = vand.u32 %v787, 4294901760
    %789 = vmatpush1.xpose.msra.mxu0 %v788
    %790 = vmatprep.subr.mxu0 0.0
    %v791 = vand.u32 %v65, 4294901760
    %v792 = vsub.f32 %v65, %v791
    %v793 = vand.u32 %v792, 4294901760
    %794 = vmatpush1.xpose.msra.mxu0 %v793
    %795 = vmatprep.subr.mxu0 0.0
    %v796 = vand.u32 %v66, 4294901760
    %v797 = vsub.f32 %v66, %v796
    %v798 = vand.u32 %v797, 4294901760
    %799 = vmatpush1.xpose.msra.mxu0 %v798
    %800 = vmatprep.subr.mxu0 0.0
    %v801 = vand.u32 %v67, 4294901760
    %v802 = vsub.f32 %v67, %v801
    %v803 = vand.u32 %v802, 4294901760
    %804 = vmatpush1.xpose.msra.mxu0 %v803
    %805 = vmatprep.subr.mxu0 0.0
    %v806 = vand.u32 %v68, 4294901760
    %v807 = vsub.f32 %v68, %v806
    %v808 = vand.u32 %v807, 4294901760
    %809 = vmatpush1.xpose.msra.mxu0 %v808
    %810 = vmatprep.subr.mxu0 0.0
    %v811 = vand.u32 %v69, 4294901760
    %v812 = vsub.f32 %v69, %v811
    %v813 = vand.u32 %v812, 4294901760
    %814 = vmatpush1.xpose.msra.mxu0 %v813
    %815 = vmatprep.subr.mxu0 0.0
    %v816 = vand.u32 %v70, 4294901760
    %v817 = vsub.f32 %v70, %v816
    %v818 = vand.u32 %v817, 4294901760
    %819 = vmatpush1.xpose.msra.mxu0 %v818
    %820 = vmatprep.subr.mxu0 0.0
    %v821 = vand.u32 %v71, 4294901760
    %v822 = vsub.f32 %v71, %v821
    %v823 = vand.u32 %v822, 4294901760
    %824 = vmatpush1.xpose.msra.mxu0 %v823
    %825 = vmatprep.subr.mxu0 0.0
    %v826 = vand.u32 %v72, 4294901760
    %v827 = vsub.f32 %v72, %v826
    %v828 = vand.u32 %v827, 4294901760
    %829 = vmatpush1.xpose.msra.mxu0 %v828
    %830 = vmatprep.subr.mxu0 0.0
    %v831 = vand.u32 %v73, 4294901760
    %v832 = vsub.f32 %v73, %v831
    %v833 = vand.u32 %v832, 4294901760
    %834 = vmatpush1.xpose.msra.mxu0 %v833
    %835 = vmatprep.subr.mxu0 0.0
    %v836 = vand.u32 %v74, 4294901760
    %v837 = vsub.f32 %v74, %v836
    %v838 = vand.u32 %v837, 4294901760
    %839 = vmatpush1.xpose.msra.mxu0 %v838
    %840 = vmatprep.subr.mxu0 0.0
    %v841 = vand.u32 %v75, 4294901760
    %v842 = vsub.f32 %v75, %v841
    %v843 = vand.u32 %v842, 4294901760
    %844 = vmatpush1.xpose.msra.mxu0 %v843
    %845 = vmatprep.subr.mxu0 0.0
    %v846 = vand.u32 %v76, 4294901760
    %v847 = vsub.f32 %v76, %v846
    %v848 = vand.u32 %v847, 4294901760
    %849 = vmatpush1.xpose.msra.mxu0 %v848
    %850 = vmatprep.subr.mxu0 0.0
    %v851 = vand.u32 %v77, 4294901760
    %v852 = vsub.f32 %v77, %v851
    %v853 = vand.u32 %v852, 4294901760
    %854 = vmatpush1.xpose.msra.mxu0 %v853
    %855 = vmatprep.subr.mxu0 0.0
    %v856 = vand.u32 %v78, 4294901760
    %v857 = vsub.f32 %v78, %v856
    %v858 = vand.u32 %v857, 4294901760
    %859 = vmatpush1.xpose.msra.mxu0 %v858
    %860 = vmatprep.subr.mxu0 0.0
    %v861 = vand.u32 %v79, 4294901760
    %v862 = vsub.f32 %v79, %v861
    %v863 = vand.u32 %v862, 4294901760
    %864 = vmatpush1.xpose.msra.mxu0 %v863
    %865 = vmatprep.subr.mxu0 0.0
    %v866 = vand.u32 %v80, 4294901760
    %v867 = vsub.f32 %v80, %v866
    %v868 = vand.u32 %v867, 4294901760
    %869 = vmatpush1.xpose.msra.mxu0 %v868
    %870 = vmatprep.subr.mxu0 0.0
    %v871 = vand.u32 %v81, 4294901760
    %v872 = vsub.f32 %v81, %v871
    %v873 = vand.u32 %v872, 4294901760
    %874 = vmatpush1.xpose.msra.mxu0 %v873
    %875 = vmatprep.subr.mxu0 0.0
    %v876 = vand.u32 %v82, 4294901760
    %v877 = vsub.f32 %v82, %v876
    %v878 = vand.u32 %v877, 4294901760
    %879 = vmatpush1.xpose.msra.mxu0 %v878
    %880 = vmatprep.subr.mxu0 0.0
    %v881 = vand.u32 %v83, 4294901760
    %v882 = vsub.f32 %v83, %v881
    %v883 = vand.u32 %v882, 4294901760
    %884 = vmatpush1.xpose.msra.mxu0 %v883
    %885 = vmatprep.subr.mxu0 0.0
    %v886 = vand.u32 %v84, 4294901760
    %v887 = vsub.f32 %v84, %v886
    %v888 = vand.u32 %v887, 4294901760
    %889 = vmatpush1.xpose.msra.mxu0 %v888
    %890 = vmatprep.subr.mxu0 0.0
    %v891 = vand.u32 %v85, 4294901760
    %v892 = vsub.f32 %v85, %v891
    %v893 = vand.u32 %v892, 4294901760
    %894 = vmatpush1.xpose.msra.mxu0 %v893
    %895 = vmatprep.subr.mxu0 0.0
    %v896 = vand.u32 %v86, 4294901760
    %v897 = vsub.f32 %v86, %v896
    %v898 = vand.u32 %v897, 4294901760
    %899 = vmatpush1.xpose.msra.mxu0 %v898
    %900 = vmatprep.subr.mxu0 0.0
    %v901 = vand.u32 %v87, 4294901760
    %v902 = vsub.f32 %v87, %v901
    %v903 = vand.u32 %v902, 4294901760
    %904 = vmatpush1.xpose.msra.mxu0 %v903
    %905 = vmatprep.subr.mxu0 0.0
    %v906 = vand.u32 %v88, 4294901760
    %v907 = vsub.f32 %v88, %v906
    %v908 = vand.u32 %v907, 4294901760
    %909 = vmatpush1.xpose.msra.mxu0 %v908
    %910 = vmatprep.subr.mxu0 0.0
    %v911 = vand.u32 %v89, 4294901760
    %v912 = vsub.f32 %v89, %v911
    %v913 = vand.u32 %v912, 4294901760
    %914 = vmatpush1.xpose.msra.mxu0 %v913
    %915 = vmatprep.subr.mxu0 0.0
    %v916 = vand.u32 %v90, 4294901760
    %v917 = vsub.f32 %v90, %v916
    %v918 = vand.u32 %v917, 4294901760
    %919 = vmatpush1.xpose.msra.mxu0 %v918
    %920 = vmatprep.subr.mxu0 0.0
    %v921 = vand.u32 %v91, 4294901760
    %v922 = vsub.f32 %v91, %v921
    %v923 = vand.u32 %v922, 4294901760
    %924 = vmatpush1.xpose.msra.mxu0 %v923
    %925 = vmatprep.subr.mxu0 0.0
    %v926 = vand.u32 %v92, 4294901760
    %v927 = vsub.f32 %v92, %v926
    %v928 = vand.u32 %v927, 4294901760
    %929 = vmatpush1.xpose.msra.mxu0 %v928
    %930 = vmatprep.subr.mxu0 0.0
    %v931 = vand.u32 %v93, 4294901760
    %v932 = vsub.f32 %v93, %v931
    %v933 = vand.u32 %v932, 4294901760
    %934 = vmatpush1.xpose.msra.mxu0 %v933
    %935 = vmatprep.subr.mxu0 0.0
    %v936 = vand.u32 %v94, 4294901760
    %v937 = vsub.f32 %v94, %v936
    %v938 = vand.u32 %v937, 4294901760
    %939 = vmatpush1.xpose.msra.mxu0 %v938
    %940 = vmatprep.subr.mxu0 0.0
    %v941 = vand.u32 %v95, 4294901760
    %v942 = vsub.f32 %v95, %v941
    %v943 = vand.u32 %v942, 4294901760
    %944 = vmatpush1.xpose.msra.mxu0 %v943
    %945 = vmatprep.mubr.f32.mxu0 0.0
    %v946 = vand.u32 %v200, 4294901760
    %947 = vmatmul.mubr.f32.gmra.mrb[0].mxu0 %v946
    %v948 = vpop.f32.mrb[0].mxu0
    %v949 = vadd.f32 %v781, %v948
    %v950 = vpop.f32.mrb[0].mxu0
    %v951 = vadd.f32 %v783, %v950
    %952 = vdwg.mxu0
    %953 = vmatprep.subr.mxu0 0.0
    %v954 = vand.u32 %v64, 4294901760
    %955 = vmatpush1.xpose.msra.mxu0 %v954
    %956 = vmatprep.subr.mxu0 0.0
    %v957 = vand.u32 %v65, 4294901760
    %958 = vmatpush1.xpose.msra.mxu0 %v957
    %959 = vmatprep.subr.mxu0 0.0
    %v960 = vand.u32 %v66, 4294901760
    %961 = vmatpush1.xpose.msra.mxu0 %v960
    %962 = vmatprep.subr.mxu0 0.0
    %v963 = vand.u32 %v67, 4294901760
    %964 = vmatpush1.xpose.msra.mxu0 %v963
    %965 = vmatprep.subr.mxu0 0.0
    %v966 = vand.u32 %v68, 4294901760
    %967 = vmatpush1.xpose.msra.mxu0 %v966
    %968 = vmatprep.subr.mxu0 0.0
    %v969 = vand.u32 %v69, 4294901760
    %970 = vmatpush1.xpose.msra.mxu0 %v969
    %971 = vmatprep.subr.mxu0 0.0
    %v972 = vand.u32 %v70, 4294901760
    %973 = vmatpush1.xpose.msra.mxu0 %v972
    %974 = vmatprep.subr.mxu0 0.0
    %v975 = vand.u32 %v71, 4294901760
    %976 = vmatpush1.xpose.msra.mxu0 %v975
    %977 = vmatprep.subr.mxu0 0.0
    %v978 = vand.u32 %v72, 4294901760
    %979 = vmatpush1.xpose.msra.mxu0 %v978
    %980 = vmatprep.subr.mxu0 0.0
    %v981 = vand.u32 %v73, 4294901760
    %982 = vmatpush1.xpose.msra.mxu0 %v981
    %983 = vmatprep.subr.mxu0 0.0
    %v984 = vand.u32 %v74, 4294901760
    %985 = vmatpush1.xpose.msra.mxu0 %v984
    %986 = vmatprep.subr.mxu0 0.0
    %v987 = vand.u32 %v75, 4294901760
    %988 = vmatpush1.xpose.msra.mxu0 %v987
    %989 = vmatprep.subr.mxu0 0.0
    %v990 = vand.u32 %v76, 4294901760
    %991 = vmatpush1.xpose.msra.mxu0 %v990
    %992 = vmatprep.subr.mxu0 0.0
    %v993 = vand.u32 %v77, 4294901760
    %994 = vmatpush1.xpose.msra.mxu0 %v993
    %995 = vmatprep.subr.mxu0 0.0
    %v996 = vand.u32 %v78, 4294901760
    %997 = vmatpush1.xpose.msra.mxu0 %v996
    %998 = vmatprep.subr.mxu0 0.0
    %v999 = vand.u32 %v79, 4294901760
    %1000 = vmatpush1.xpose.msra.mxu0 %v999
    %1001 = vmatprep.subr.mxu0 0.0
    %v1002 = vand.u32 %v80, 4294901760
    %1003 = vmatpush1.xpose.msra.mxu0 %v1002
    %1004 = vmatprep.subr.mxu0 0.0
    %v1005 = vand.u32 %v81, 4294901760
    %1006 = vmatpush1.xpose.msra.mxu0 %v1005
    %1007 = vmatprep.subr.mxu0 0.0
    %v1008 = vand.u32 %v82, 4294901760
    %1009 = vmatpush1.xpose.msra.mxu0 %v1008
    %1010 = vmatprep.subr.mxu0 0.0
    %v1011 = vand.u32 %v83, 4294901760
    %1012 = vmatpush1.xpose.msra.mxu0 %v1011
    %1013 = vmatprep.subr.mxu0 0.0
    %v1014 = vand.u32 %v84, 4294901760
    %1015 = vmatpush1.xpose.msra.mxu0 %v1014
    %1016 = vmatprep.subr.mxu0 0.0
    %v1017 = vand.u32 %v85, 4294901760
    %1018 = vmatpush1.xpose.msra.mxu0 %v1017
    %1019 = vmatprep.subr.mxu0 0.0
    %v1020 = vand.u32 %v86, 4294901760
    %1021 = vmatpush1.xpose.msra.mxu0 %v1020
    %1022 = vmatprep.subr.mxu0 0.0
    %v1023 = vand.u32 %v87, 4294901760
    %1024 = vmatpush1.xpose.msra.mxu0 %v1023
    %1025 = vmatprep.subr.mxu0 0.0
    %v1026 = vand.u32 %v88, 4294901760
    %1027 = vmatpush1.xpose.msra.mxu0 %v1026
    %1028 = vmatprep.subr.mxu0 0.0
    %v1029 = vand.u32 %v89, 4294901760
    %1030 = vmatpush1.xpose.msra.mxu0 %v1029
    %1031 = vmatprep.subr.mxu0 0.0
    %v1032 = vand.u32 %v90, 4294901760
    %1033 = vmatpush1.xpose.msra.mxu0 %v1032
    %1034 = vmatprep.subr.mxu0 0.0
    %v1035 = vand.u32 %v91, 4294901760
    %1036 = vmatpush1.xpose.msra.mxu0 %v1035
    %1037 = vmatprep.subr.mxu0 0.0
    %v1038 = vand.u32 %v92, 4294901760
    %1039 = vmatpush1.xpose.msra.mxu0 %v1038
    %1040 = vmatprep.subr.mxu0 0.0
    %v1041 = vand.u32 %v93, 4294901760
    %1042 = vmatpush1.xpose.msra.mxu0 %v1041
    %1043 = vmatprep.subr.mxu0 0.0
    %v1044 = vand.u32 %v94, 4294901760
    %1045 = vmatpush1.xpose.msra.mxu0 %v1044
    %1046 = vmatprep.subr.mxu0 0.0
    %v1047 = vand.u32 %v95, 4294901760
    %1048 = vmatpush1.xpose.msra.mxu0 %v1047
    %1049 = vmatprep.mubr.f32.mxu0 0.0
    %v1050 = vand.u32 %v200, 4294901760
    %1051 = vmatmul.mubr.f32.gmra.mrb[0].mxu0 %v1050
    %v1052 = vpop.f32.mrb[0].mxu0
    %v1053 = vadd.f32 %v949, %v1052
    %v1054 = vpop.f32.mrb[0].mxu0
    %v1055 = vadd.f32 %v951, %v1054
    %1056 = vdwg.mxu0
    %1057 = vmatprep.subr.mxu0 0.0
    %v1058 = vand.u32 %v96, 4294901760
    %1059 = vmatpush1.xpose.msra.mxu0 %v1058
    %1060 = vmatprep.subr.mxu0 0.0
    %v1061 = vand.u32 %v97, 4294901760
    %1062 = vmatpush1.xpose.msra.mxu0 %v1061
    %1063 = vmatprep.subr.mxu0 0.0
    %v1064 = vand.u32 %v98, 4294901760
    %1065 = vmatpush1.xpose.msra.mxu0 %v1064
    %1066 = vmatprep.subr.mxu0 0.0
    %v1067 = vand.u32 %v99, 4294901760
    %1068 = vmatpush1.xpose.msra.mxu0 %v1067
    %1069 = vmatprep.subr.mxu0 0.0
    %v1070 = vand.u32 %v100, 4294901760
    %1071 = vmatpush1.xpose.msra.mxu0 %v1070
    %1072 = vmatprep.subr.mxu0 0.0
    %v1073 = vand.u32 %v101, 4294901760
    %1074 = vmatpush1.xpose.msra.mxu0 %v1073
    %1075 = vmatprep.subr.mxu0 0.0
    %v1076 = vand.u32 %v102, 4294901760
    %1077 = vmatpush1.xpose.msra.mxu0 %v1076
    %1078 = vmatprep.subr.mxu0 0.0
    %v1079 = vand.u32 %v103, 4294901760
    %1080 = vmatpush1.xpose.msra.mxu0 %v1079
    %1081 = vmatprep.subr.mxu0 0.0
    %1082 = vmatpush1.xpose.msra.mxu0 0.0
    %1083 = vmatprep.subr.mxu0 0.0
    %1084 = vmatpush1.xpose.msra.mxu0 0.0
    %1085 = vmatprep.subr.mxu0 0.0
    %1086 = vmatpush1.xpose.msra.mxu0 0.0
    %1087 = vmatprep.subr.mxu0 0.0
    %1088 = vmatpush1.xpose.msra.mxu0 0.0
    %1089 = vmatprep.subr.mxu0 0.0
    %1090 = vmatpush1.xpose.msra.mxu0 0.0
    %1091 = vmatprep.subr.mxu0 0.0
    %1092 = vmatpush1.xpose.msra.mxu0 0.0
    %1093 = vmatprep.subr.mxu0 0.0
    %1094 = vmatpush1.xpose.msra.mxu0 0.0
    %1095 = vmatprep.subr.mxu0 0.0
    %1096 = vmatpush1.xpose.msra.mxu0 0.0
    %1097 = vmatprep.subr.mxu0 0.0
    %1098 = vmatpush1.xpose.msra.mxu0 0.0
    %1099 = vmatprep.subr.mxu0 0.0
    %1100 = vmatpush1.xpose.msra.mxu0 0.0
    %1101 = vmatprep.subr.mxu0 0.0
    %1102 = vmatpush1.xpose.msra.mxu0 0.0
    %1103 = vmatprep.subr.mxu0 0.0
    %1104 = vmatpush1.xpose.msra.mxu0 0.0
    %1105 = vmatprep.subr.mxu0 0.0
    %1106 = vmatpush1.xpose.msra.mxu0 0.0
    %1107 = vmatprep.subr.mxu0 0.0
    %1108 = vmatpush1.xpose.msra.mxu0 0.0
    %1109 = vmatprep.subr.mxu0 0.0
    %1110 = vmatpush1.xpose.msra.mxu0 0.0
    %1111 = vmatprep.subr.mxu0 0.0
    %1112 = vmatpush1.xpose.msra.mxu0 0.0
    %1113 = vmatprep.subr.mxu0 0.0
    %1114 = vmatpush1.xpose.msra.mxu0 0.0
    %1115 = vmatprep.subr.mxu0 0.0
    %1116 = vmatpush1.xpose.msra.mxu0 0.0
    %1117 = vmatprep.subr.mxu0 0.0
    %1118 = vmatpush1.xpose.msra.mxu0 0.0
    %1119 = vmatprep.subr.mxu0 0.0
    %1120 = vmatpush1.xpose.msra.mxu0 0.0
    %1121 = vmatprep.subr.mxu0 0.0
    %1122 = vmatpush1.xpose.msra.mxu0 0.0
    %1123 = vmatprep.subr.mxu0 0.0
    %1124 = vmatpush1.xpose.msra.mxu0 0.0
    %1125 = vmatprep.subr.mxu0 0.0
    %1126 = vmatpush1.xpose.msra.mxu0 0.0
    %1127 = vmatprep.subr.mxu0 0.0
    %1128 = vmatpush1.xpose.msra.mxu0 0.0
    %1129 = vmatprep.mubr.f32.mxu0 0.0
    %v1130 = vand.u32 %v200, 4294901760
    %v1131 = vsub.f32 %v200, %v1130
    %v1132 = vand.u32 %v1131, 4294901760
    %v1133 = vsub.f32 %v1131, %v1132
    %v1134 = vand.u32 %v1133, 4294901760
    %1135 = vmatmul.mubr.f32.gmra.mrb[0].mxu0 %v1134
    %v1136 = vpop.f32.mrb[0].mxu0
    %v1137 = vadd.f32 0.0, %v1136
    %v1138 = vpop.f32.mrb[0].mxu0
    %1139 = vdwg.mxu0
    %1140 = vmatprep.subr.mxu0 0.0
    %v1141 = vand.u32 %v96, 4294901760
    %v1142 = vsub.f32 %v96, %v1141
    %v1143 = vand.u32 %v1142, 4294901760
    %v1144 = vsub.f32 %v1142, %v1143
    %v1145 = vand.u32 %v1144, 4294901760
    %1146 = vmatpush1.xpose.msra.mxu0 %v1145
    %1147 = vmatprep.subr.mxu0 0.0
    %v1148 = vand.u32 %v97, 4294901760
    %v1149 = vsub.f32 %v97, %v1148
    %v1150 = vand.u32 %v1149, 4294901760
    %v1151 = vsub.f32 %v1149, %v1150
    %v1152 = vand.u32 %v1151, 4294901760
    %1153 = vmatpush1.xpose.msra.mxu0 %v1152
    %1154 = vmatprep.subr.mxu0 0.0
    %v1155 = vand.u32 %v98, 4294901760
    %v1156 = vsub.f32 %v98, %v1155
    %v1157 = vand.u32 %v1156, 4294901760
    %v1158 = vsub.f32 %v1156, %v1157
    %v1159 = vand.u32 %v1158, 4294901760
    %1160 = vmatpush1.xpose.msra.mxu0 %v1159
    %1161 = vmatprep.subr.mxu0 0.0
    %v1162 = vand.u32 %v99, 4294901760
    %v1163 = vsub.f32 %v99, %v1162
    %v1164 = vand.u32 %v1163, 4294901760
    %v1165 = vsub.f32 %v1163, %v1164
    %v1166 = vand.u32 %v1165, 4294901760
    %1167 = vmatpush1.xpose.msra.mxu0 %v1166
    %1168 = vmatprep.subr.mxu0 0.0
    %v1169 = vand.u32 %v100, 4294901760
    %v1170 = vsub.f32 %v100, %v1169
    %v1171 = vand.u32 %v1170, 4294901760
    %v1172 = vsub.f32 %v1170, %v1171
    %v1173 = vand.u32 %v1172, 4294901760
    %1174 = vmatpush1.xpose.msra.mxu0 %v1173
    %1175 = vmatprep.subr.mxu0 0.0
    %v1176 = vand.u32 %v101, 4294901760
    %v1177 = vsub.f32 %v101, %v1176
    %v1178 = vand.u32 %v1177, 4294901760
    %v1179 = vsub.f32 %v1177, %v1178
    %v1180 = vand.u32 %v1179, 4294901760
    %1181 = vmatpush1.xpose.msra.mxu0 %v1180
    %1182 = vmatprep.subr.mxu0 0.0
    %v1183 = vand.u32 %v102, 4294901760
    %v1184 = vsub.f32 %v102, %v1183
    %v1185 = vand.u32 %v1184, 4294901760
    %v1186 = vsub.f32 %v1184, %v1185
    %v1187 = vand.u32 %v1186, 4294901760
    %1188 = vmatpush1.xpose.msra.mxu0 %v1187
    %1189 = vmatprep.subr.mxu0 0.0
    %v1190 = vand.u32 %v103, 4294901760
    %v1191 = vsub.f32 %v103, %v1190
    %v1192 = vand.u32 %v1191, 4294901760
    %v1193 = vsub.f32 %v1191, %v1192
    %v1194 = vand.u32 %v1193, 4294901760
    %1195 = vmatpush1.xpose.msra.mxu0 %v1194
    %1196 = vmatprep.subr.mxu0 0.0
    %1197 = vmatpush1.xpose.msra.mxu0 0.0
    %1198 = vmatprep.subr.mxu0 0.0
    %1199 = vmatpush1.xpose.msra.mxu0 0.0
    %1200 = vmatprep.subr.mxu0 0.0
    %1201 = vmatpush1.xpose.msra.mxu0 0.0
    %1202 = vmatprep.subr.mxu0 0.0
    %1203 = vmatpush1.xpose.msra.mxu0 0.0
    %1204 = vmatprep.subr.mxu0 0.0
    %1205 = vmatpush1.xpose.msra.mxu0 0.0
    %1206 = vmatprep.subr.mxu0 0.0
    %1207 = vmatpush1.xpose.msra.mxu0 0.0
    %1208 = vmatprep.subr.mxu0 0.0
    %1209 = vmatpush1.xpose.msra.mxu0 0.0
    %1210 = vmatprep.subr.mxu0 0.0
    %1211 = vmatpush1.xpose.msra.mxu0 0.0
    %1212 = vmatprep.subr.mxu0 0.0
    %1213 = vmatpush1.xpose.msra.mxu0 0.0
    %1214 = vmatprep.subr.mxu0 0.0
    %1215 = vmatpush1.xpose.msra.mxu0 0.0
    %1216 = vmatprep.subr.mxu0 0.0
    %1217 = vmatpush1.xpose.msra.mxu0 0.0
    %1218 = vmatprep.subr.mxu0 0.0
    %1219 = vmatpush1.xpose.msra.mxu0 0.0
    %1220 = vmatprep.subr.mxu0 0.0
    %1221 = vmatpush1.xpose.msra.mxu0 0.0
    %1222 = vmatprep.subr.mxu0 0.0
    %1223 = vmatpush1.xpose.msra.mxu0 0.0
    %1224 = vmatprep.subr.mxu0 0.0
    %1225 = vmatpush1.xpose.msra.mxu0 0.0
    %1226 = vmatprep.subr.mxu0 0.0
    %1227 = vmatpush1.xpose.msra.mxu0 0.0
    %1228 = vmatprep.subr.mxu0 0.0
    %1229 = vmatpush1.xpose.msra.mxu0 0.0
    %1230 = vmatprep.subr.mxu0 0.0
    %1231 = vmatpush1.xpose.msra.mxu0 0.0
    %1232 = vmatprep.subr.mxu0 0.0
    %1233 = vmatpush1.xpose.msra.mxu0 0.0
    %1234 = vmatprep.subr.mxu0 0.0
    %1235 = vmatpush1.xpose.msra.mxu0 0.0
    %1236 = vmatprep.subr.mxu0 0.0
    %1237 = vmatpush1.xpose.msra.mxu0 0.0
    %1238 = vmatprep.subr.mxu0 0.0
    %1239 = vmatpush1.xpose.msra.mxu0 0.0
    %1240 = vmatprep.subr.mxu0 0.0
    %1241 = vmatpush1.xpose.msra.mxu0 0.0
    %1242 = vmatprep.subr.mxu0 0.0
    %1243 = vmatpush1.xpose.msra.mxu0 0.0
    %1244 = vmatprep.mubr.f32.mxu0 0.0
    %v1245 = vand.u32 %v200, 4294901760
    %1246 = vmatmul.mubr.f32.gmra.mrb[0].mxu0 %v1245
    %v1247 = vpop.f32.mrb[0].mxu0
    %v1248 = vadd.f32 %v1137, %v1247
    %v1249 = vpop.f32.mrb[0].mxu0
    %1250 = vdwg.mxu0
    %1251 = vmatprep.subr.mxu0 0.0
    %v1252 = vand.u32 %v96, 4294901760
    %v1253 = vsub.f32 %v96, %v1252
    %1254 = vmatpush1.xpose.msra.mxu0 %v1253
    %1255 = vmatprep.subr.mxu0 0.0
    %v1256 = vand.u32 %v97, 4294901760
    %v1257 = vsub.f32 %v97, %v1256
    %1258 = vmatpush1.xpose.msra.mxu0 %v1257
    %1259 = vmatprep.subr.mxu0 0.0
    %v1260 = vand.u32 %v98, 4294901760
    %v1261 = vsub.f32 %v98, %v1260
    %1262 = vmatpush1.xpose.msra.mxu0 %v1261
    %1263 = vmatprep.subr.mxu0 0.0
    %v1264 = vand.u32 %v99, 4294901760
    %v1265 = vsub.f32 %v99, %v1264
    %1266 = vmatpush1.xpose.msra.mxu0 %v1265
    %1267 = vmatprep.subr.mxu0 0.0
    %v1268 = vand.u32 %v100, 4294901760
    %v1269 = vsub.f32 %v100, %v1268
    %1270 = vmatpush1.xpose.msra.mxu0 %v1269
    %1271 = vmatprep.subr.mxu0 0.0
    %v1272 = vand.u32 %v101, 4294901760
    %v1273 = vsub.f32 %v101, %v1272
    %1274 = vmatpush1.xpose.msra.mxu0 %v1273
    %1275 = vmatprep.subr.mxu0 0.0
    %v1276 = vand.u32 %v102, 4294901760
    %v1277 = vsub.f32 %v102, %v1276
    %1278 = vmatpush1.xpose.msra.mxu0 %v1277
    %1279 = vmatprep.subr.mxu0 0.0
    %v1280 = vand.u32 %v103, 4294901760
    %v1281 = vsub.f32 %v103, %v1280
    %1282 = vmatpush1.xpose.msra.mxu0 %v1281
    %1283 = vmatprep.subr.mxu0 0.0
    %1284 = vmatpush1.xpose.msra.mxu0 0.0
    %1285 = vmatprep.subr.mxu0 0.0
    %1286 = vmatpush1.xpose.msra.mxu0 0.0
    %1287 = vmatprep.subr.mxu0 0.0
    %1288 = vmatpush1.xpose.msra.mxu0 0.0
    %1289 = vmatprep.subr.mxu0 0.0
    %1290 = vmatpush1.xpose.msra.mxu0 0.0
    %1291 = vmatprep.subr.mxu0 0.0
    %1292 = vmatpush1.xpose.msra.mxu0 0.0
    %1293 = vmatprep.subr.mxu0 0.0
    %1294 = vmatpush1.xpose.msra.mxu0 0.0
    %1295 = vmatprep.subr.mxu0 0.0
    %1296 = vmatpush1.xpose.msra.mxu0 0.0
    %1297 = vmatprep.subr.mxu0 0.0
    %1298 = vmatpush1.xpose.msra.mxu0 0.0
    %1299 = vmatprep.subr.mxu0 0.0
    %1300 = vmatpush1.xpose.msra.mxu0 0.0
    %1301 = vmatprep.subr.mxu0 0.0
    %1302 = vmatpush1.xpose.msra.mxu0 0.0
    %1303 = vmatprep.subr.mxu0 0.0
    %1304 = vmatpush1.xpose.msra.mxu0 0.0
    %1305 = vmatprep.subr.mxu0 0.0
    %1306 = vmatpush1.xpose.msra.mxu0 0.0
    %1307 = vmatprep.subr.mxu0 0.0
    %1308 = vmatpush1.xpose.msra.mxu0 0.0
    %1309 = vmatprep.subr.mxu0 0.0
    %1310 = vmatpush1.xpose.msra.mxu0 0.0
    %1311 = vmatprep.subr.mxu0 0.0
    %1312 = vmatpush1.xpose.msra.mxu0 0.0
    %1313 = vmatprep.subr.mxu0 0.0
    %1314 = vmatpush1.xpose.msra.mxu0 0.0
    %1315 = vmatprep.subr.mxu0 0.0
    %1316 = vmatpush1.xpose.msra.mxu0 0.0
    %1317 = vmatprep.subr.mxu0 0.0
    %1318 = vmatpush1.xpose.msra.mxu0 0.0
    %1319 = vmatprep.subr.mxu0 0.0
    %1320 = vmatpush1.xpose.msra.mxu0 0.0
    %1321 = vmatprep.subr.mxu0 0.0
    %1322 = vmatpush1.xpose.msra.mxu0 0.0
    %1323 = vmatprep.subr.mxu0 0.0
    %1324 = vmatpush1.xpose.msra.mxu0 0.0
    %1325 = vmatprep.subr.mxu0 0.0
    %1326 = vmatpush1.xpose.msra.mxu0 0.0
    %1327 = vmatprep.subr.mxu0 0.0
    %1328 = vmatpush1.xpose.msra.mxu0 0.0
    %1329 = vmatprep.subr.mxu0 0.0
    %1330 = vmatpush1.xpose.msra.mxu0 0.0
    %1331 = vmatprep.mubr.f32.mxu0 0.0
    %v1332 = vand.u32 %v200, 4294901760
    %v1333 = vsub.f32 %v200, %v1332
    %1334 = vmatmul.mubr.f32.gmra.mrb[0].mxu0 %v1333
    %v1335 = vpop.f32.mrb[0].mxu0
    %v1336 = vadd.f32 %v1248, %v1335
    %v1337 = vpop.f32.mrb[0].mxu0
    %1338 = vdwg.mxu0
    %1339 = vmatprep.subr.mxu0 0.0
    %v1340 = vand.u32 %v96, 4294901760
    %1341 = vmatpush1.xpose.msra.mxu0 %v1340
    %1342 = vmatprep.subr.mxu0 0.0
    %v1343 = vand.u32 %v97, 4294901760
    %1344 = vmatpush1.xpose.msra.mxu0 %v1343
    %1345 = vmatprep.subr.mxu0 0.0
    %v1346 = vand.u32 %v98, 4294901760
    %1347 = vmatpush1.xpose.msra.mxu0 %v1346
    %1348 = vmatprep.subr.mxu0 0.0
    %v1349 = vand.u32 %v99, 4294901760
    %1350 = vmatpush1.xpose.msra.mxu0 %v1349
    %1351 = vmatprep.subr.mxu0 0.0
    %v1352 = vand.u32 %v100, 4294901760
    %1353 = vmatpush1.xpose.msra.mxu0 %v1352
    %1354 = vmatprep.subr.mxu0 0.0
    %v1355 = vand.u32 %v101, 4294901760
    %1356 = vmatpush1.xpose.msra.mxu0 %v1355
    %1357 = vmatprep.subr.mxu0 0.0
    %v1358 = vand.u32 %v102, 4294901760
    %1359 = vmatpush1.xpose.msra.mxu0 %v1358
    %1360 = vmatprep.subr.mxu0 0.0
    %v1361 = vand.u32 %v103, 4294901760
    %1362 = vmatpush1.xpose.msra.mxu0 %v1361
    %1363 = vmatprep.subr.mxu0 0.0
    %1364 = vmatpush1.xpose.msra.mxu0 0.0
    %1365 = vmatprep.subr.mxu0 0.0
    %1366 = vmatpush1.xpose.msra.mxu0 0.0
    %1367 = vmatprep.subr.mxu0 0.0
    %1368 = vmatpush1.xpose.msra.mxu0 0.0
    %1369 = vmatprep.subr.mxu0 0.0
    %1370 = vmatpush1.xpose.msra.mxu0 0.0
    %1371 = vmatprep.subr.mxu0 0.0
    %1372 = vmatpush1.xpose.msra.mxu0 0.0
    %1373 = vmatprep.subr.mxu0 0.0
    %1374 = vmatpush1.xpose.msra.mxu0 0.0
    %1375 = vmatprep.subr.mxu0 0.0
    %1376 = vmatpush1.xpose.msra.mxu0 0.0
    %1377 = vmatprep.subr.mxu0 0.0
    %1378 = vmatpush1.xpose.msra.mxu0 0.0
    %1379 = vmatprep.subr.mxu0 0.0
    %1380 = vmatpush1.xpose.msra.mxu0 0.0
    %1381 = vmatprep.subr.mxu0 0.0
    %1382 = vmatpush1.xpose.msra.mxu0 0.0
    %1383 = vmatprep.subr.mxu0 0.0
    %1384 = vmatpush1.xpose.msra.mxu0 0.0
    %1385 = vmatprep.subr.mxu0 0.0
    %1386 = vmatpush1.xpose.msra.mxu0 0.0
    %1387 = vmatprep.subr.mxu0 0.0
    %1388 = vmatpush1.xpose.msra.mxu0 0.0
    %1389 = vmatprep.subr.mxu0 0.0
    %1390 = vmatpush1.xpose.msra.mxu0 0.0
    %1391 = vmatprep.subr.mxu0 0.0
    %1392 = vmatpush1.xpose.msra.mxu0 0.0
    %1393 = vmatprep.subr.mxu0 0.0
    %1394 = vmatpush1.xpose.msra.mxu0 0.0
    %1395 = vmatprep.subr.mxu0 0.0
    %1396 = vmatpush1.xpose.msra.mxu0 0.0
    %1397 = vmatprep.subr.mxu0 0.0
    %1398 = vmatpush1.xpose.msra.mxu0 0.0
    %1399 = vmatprep.subr.mxu0 0.0
    %1400 = vmatpush1.xpose.msra.mxu0 0.0
    %1401 = vmatprep.subr.mxu0 0.0
    %1402 = vmatpush1.xpose.msra.mxu0 0.0
    %1403 = vmatprep.subr.mxu0 0.0
    %1404 = vmatpush1.xpose.msra.mxu0 0.0
    %1405 = vmatprep.subr.mxu0 0.0
    %1406 = vmatpush1.xpose.msra.mxu0 0.0
    %1407 = vmatprep.subr.mxu0 0.0
    %1408 = vmatpush1.xpose.msra.mxu0 0.0
    %1409 = vmatprep.subr.mxu0 0.0
    %1410 = vmatpush1.xpose.msra.mxu0 0.0
    %1411 = vmatprep.mubr.f32.mxu0 0.0
    %v1412 = vand.u32 %v200, 4294901760
    %v1413 = vsub.f32 %v200, %v1412
    %v1414 = vand.u32 %v1413, 4294901760
    %1415 = vmatmul.mubr.f32.gmra.mrb[0].mxu0 %v1414
    %v1416 = vpop.f32.mrb[0].mxu0
    %v1417 = vadd.f32 %v1336, %v1416
    %v1418 = vpop.f32.mrb[0].mxu0
    %1419 = vdwg.mxu0
    %1420 = vmatprep.subr.mxu0 0.0
    %v1421 = vand.u32 %v96, 4294901760
    %v1422 = vsub.f32 %v96, %v1421
    %v1423 = vand.u32 %v1422, 4294901760
    %1424 = vmatpush1.xpose.msra.mxu0 %v1423
    %1425 = vmatprep.subr.mxu0 0.0
    %v1426 = vand.u32 %v97, 4294901760
    %v1427 = vsub.f32 %v97, %v1426
    %v1428 = vand.u32 %v1427, 4294901760
    %1429 = vmatpush1.xpose.msra.mxu0 %v1428
    %1430 = vmatprep.subr.mxu0 0.0
    %v1431 = vand.u32 %v98, 4294901760
    %v1432 = vsub.f32 %v98, %v1431
    %v1433 = vand.u32 %v1432, 4294901760
    %1434 = vmatpush1.xpose.msra.mxu0 %v1433
    %1435 = vmatprep.subr.mxu0 0.0
    %v1436 = vand.u32 %v99, 4294901760
    %v1437 = vsub.f32 %v99, %v1436
    %v1438 = vand.u32 %v1437, 4294901760
    %1439 = vmatpush1.xpose.msra.mxu0 %v1438
    %1440 = vmatprep.subr.mxu0 0.0
    %v1441 = vand.u32 %v100, 4294901760
    %v1442 = vsub.f32 %v100, %v1441
    %v1443 = vand.u32 %v1442, 4294901760
    %1444 = vmatpush1.xpose.msra.mxu0 %v1443
    %1445 = vmatprep.subr.mxu0 0.0
    %v1446 = vand.u32 %v101, 4294901760
    %v1447 = vsub.f32 %v101, %v1446
    %v1448 = vand.u32 %v1447, 4294901760
    %1449 = vmatpush1.xpose.msra.mxu0 %v1448
    %1450 = vmatprep.subr.mxu0 0.0
    %v1451 = vand.u32 %v102, 4294901760
    %v1452 = vsub.f32 %v102, %v1451
    %v1453 = vand.u32 %v1452, 4294901760
    %1454 = vmatpush1.xpose.msra.mxu0 %v1453
    %1455 = vmatprep.subr.mxu0 0.0
    %v1456 = vand.u32 %v103, 4294901760
    %v1457 = vsub.f32 %v103, %v1456
    %v1458 = vand.u32 %v1457, 4294901760
    %1459 = vmatpush1.xpose.msra.mxu0 %v1458
    %1460 = vmatprep.subr.mxu0 0.0
    %1461 = vmatpush1.xpose.msra.mxu0 0.0
    %1462 = vmatprep.subr.mxu0 0.0
    %1463 = vmatpush1.xpose.msra.mxu0 0.0
    %1464 = vmatprep.subr.mxu0 0.0
    %1465 = vmatpush1.xpose.msra.mxu0 0.0
    %1466 = vmatprep.subr.mxu0 0.0
    %1467 = vmatpush1.xpose.msra.mxu0 0.0
    %1468 = vmatprep.subr.mxu0 0.0
    %1469 = vmatpush1.xpose.msra.mxu0 0.0
    %1470 = vmatprep.subr.mxu0 0.0
    %1471 = vmatpush1.xpose.msra.mxu0 0.0
    %1472 = vmatprep.subr.mxu0 0.0
    %1473 = vmatpush1.xpose.msra.mxu0 0.0
    %1474 = vmatprep.subr.mxu0 0.0
    %1475 = vmatpush1.xpose.msra.mxu0 0.0
    %1476 = vmatprep.subr.mxu0 0.0
    %1477 = vmatpush1.xpose.msra.mxu0 0.0
    %1478 = vmatprep.subr.mxu0 0.0
    %1479 = vmatpush1.xpose.msra.mxu0 0.0
    %1480 = vmatprep.subr.mxu0 0.0
    %1481 = vmatpush1.xpose.msra.mxu0 0.0
    %1482 = vmatprep.subr.mxu0 0.0
    %1483 = vmatpush1.xpose.msra.mxu0 0.0
    %1484 = vmatprep.subr.mxu0 0.0
    %1485 = vmatpush1.xpose.msra.mxu0 0.0
    %1486 = vmatprep.subr.mxu0 0.0
    %1487 = vmatpush1.xpose.msra.mxu0 0.0
    %1488 = vmatprep.subr.mxu0 0.0
    %1489 = vmatpush1.xpose.msra.mxu0 0.0
    %1490 = vmatprep.subr.mxu0 0.0
    %1491 = vmatpush1.xpose.msra.mxu0 0.0
    %1492 = vmatprep.subr.mxu0 0.0
    %1493 = vmatpush1.xpose.msra.mxu0 0.0
    %1494 = vmatprep.subr.mxu0 0.0
    %1495 = vmatpush1.xpose.msra.mxu0 0.0
    %1496 = vmatprep.subr.mxu0 0.0
    %1497 = vmatpush1.xpose.msra.mxu0 0.0
    %1498 = vmatprep.subr.mxu0 0.0
    %1499 = vmatpush1.xpose.msra.mxu0 0.0
    %1500 = vmatprep.subr.mxu0 0.0
    %1501 = vmatpush1.xpose.msra.mxu0 0.0
    %1502 = vmatprep.subr.mxu0 0.0
    %1503 = vmatpush1.xpose.msra.mxu0 0.0
    %1504 = vmatprep.subr.mxu0 0.0
    %1505 = vmatpush1.xpose.msra.mxu0 0.0
    %1506 = vmatprep.subr.mxu0 0.0
    %1507 = vmatpush1.xpose.msra.mxu0 0.0
    %1508 = vmatprep.mubr.f32.mxu0 0.0
    %v1509 = vand.u32 %v200, 4294901760
    %1510 = vmatmul.mubr.f32.gmra.mrb[0].mxu0 %v1509
    %v1511 = vpop.f32.mrb[0].mxu0
    %v1512 = vadd.f32 %v1417, %v1511
    %v1513 = vpop.f32.mrb[0].mxu0
    %1514 = vdwg.mxu0
    %1515 = vmatprep.subr.mxu0 0.0
    %v1516 = vand.u32 %v96, 4294901760
    %1517 = vmatpush1.xpose.msra.mxu0 %v1516
    %1518 = vmatprep.subr.mxu0 0.0
    %v1519 = vand.u32 %v97, 4294901760
    %1520 = vmatpush1.xpose.msra.mxu0 %v1519
    %1521 = vmatprep.subr.mxu0 0.0
    %v1522 = vand.u32 %v98, 4294901760
    %1523 = vmatpush1.xpose.msra.mxu0 %v1522
    %1524 = vmatprep.subr.mxu0 0.0
    %v1525 = vand.u32 %v99, 4294901760
    %1526 = vmatpush1.xpose.msra.mxu0 %v1525
    %1527 = vmatprep.subr.mxu0 0.0
    %v1528 = vand.u32 %v100, 4294901760
    %1529 = vmatpush1.xpose.msra.mxu0 %v1528
    %1530 = vmatprep.subr.mxu0 0.0
    %v1531 = vand.u32 %v101, 4294901760
    %1532 = vmatpush1.xpose.msra.mxu0 %v1531
    %1533 = vmatprep.subr.mxu0 0.0
    %v1534 = vand.u32 %v102, 4294901760
    %1535 = vmatpush1.xpose.msra.mxu0 %v1534
    %1536 = vmatprep.subr.mxu0 0.0
    %v1537 = vand.u32 %v103, 4294901760
    %1538 = vmatpush1.xpose.msra.mxu0 %v1537
    %1539 = vmatprep.subr.mxu0 0.0
    %1540 = vmatpush1.xpose.msra.mxu0 0.0
    %1541 = vmatprep.subr.mxu0 0.0
    %1542 = vmatpush1.xpose.msra.mxu0 0.0
    %1543 = vmatprep.subr.mxu0 0.0
    %1544 = vmatpush1.xpose.msra.mxu0 0.0
    %1545 = vmatprep.subr.mxu0 0.0
    %1546 = vmatpush1.xpose.msra.mxu0 0.0
    %1547 = vmatprep.subr.mxu0 0.0
    %1548 = vmatpush1.xpose.msra.mxu0 0.0
    %1549 = vmatprep.subr.mxu0 0.0
    %1550 = vmatpush1.xpose.msra.mxu0 0.0
    %1551 = vmatprep.subr.mxu0 0.0
    %1552 = vmatpush1.xpose.msra.mxu0 0.0
    %1553 = vmatprep.subr.mxu0 0.0
    %1554 = vmatpush1.xpose.msra.mxu0 0.0
    %1555 = vmatprep.subr.mxu0 0.0
    %1556 = vmatpush1.xpose.msra.mxu0 0.0
    %1557 = vmatprep.subr.mxu0 0.0
    %1558 = vmatpush1.xpose.msra.mxu0 0.0
    %1559 = vmatprep.subr.mxu0 0.0
    %1560 = vmatpush1.xpose.msra.mxu0 0.0
    %1561 = vmatprep.subr.mxu0 0.0
    %1562 = vmatpush1.xpose.msra.mxu0 0.0
    %1563 = vmatprep.subr.mxu0 0.0
    %1564 = vmatpush1.xpose.msra.mxu0 0.0
    %1565 = vmatprep.subr.mxu0 0.0
    %1566 = vmatpush1.xpose.msra.mxu0 0.0
    %1567 = vmatprep.subr.mxu0 0.0
    %1568 = vmatpush1.xpose.msra.mxu0 0.0
    %1569 = vmatprep.subr.mxu0 0.0
    %1570 = vmatpush1.xpose.msra.mxu0 0.0
    %1571 = vmatprep.subr.mxu0 0.0
    %1572 = vmatpush1.xpose.msra.mxu0 0.0
    %1573 = vmatprep.subr.mxu0 0.0
    %1574 = vmatpush1.xpose.msra.mxu0 0.0
    %1575 = vmatprep.subr.mxu0 0.0
    %1576 = vmatpush1.xpose.msra.mxu0 0.0
    %1577 = vmatprep.subr.mxu0 0.0
    %1578 = vmatpush1.xpose.msra.mxu0 0.0
    %1579 = vmatprep.subr.mxu0 0.0
    %1580 = vmatpush1.xpose.msra.mxu0 0.0
    %1581 = vmatprep.subr.mxu0 0.0
    %1582 = vmatpush1.xpose.msra.mxu0 0.0
    %1583 = vmatprep.subr.mxu0 0.0
    %1584 = vmatpush1.xpose.msra.mxu0 0.0
    %1585 = vmatprep.subr.mxu0 0.0
    %1586 = vmatpush1.xpose.msra.mxu0 0.0
    %1587 = vmatprep.mubr.f32.mxu0 0.0
    %v1588 = vand.u32 %v200, 4294901760
    %1589 = vmatmul.mubr.f32.gmra.mrb[0].mxu0 %v1588
    %v1590 = vpop.f32.mrb[0].mxu0
    %v1591 = vadd.f32 %v1512, %v1590
    %v1592 = vpop.f32.mrb[0].mxu0
    %1593 = vdwg.mxu0
    %v1594 = vmul.f32 %v1053, 11.313708
    %v1595 = vmul.f32 %v1055, 11.313708
    %v1596 = vmul.f32 %v1591, 11.313708
    %v1597 = vlaneseq
    %v1598 = vshrl.u32 %v1597, 7
    %v1599 = vlaneseq
    %v1600 = vand.u32 %v1599, 127
    %v1601 = vadd.s32 %v1600, 128
    %v1602 = vadd.s32 %v1600, 256
    %v1603 = vmul.u32 %v1598, 40
    %vm1604 = vcmp.ge.s32.totalorder %v1600, %v1603
    %vm1605 = vcmp.ge.s32.totalorder %v1601, %v1603
    %vm1606 = vcmp.ge.s32.totalorder %v1602, %v1603
    %v1607 = vadd.s32 %v1598, 1
    %v1608 = vmul.u32 %v1607, 40
    %vm1609 = vcmp.lt.s32.totalorder %v1600, %v1608
    %vm1610 = vcmp.lt.s32.totalorder %v1601, %v1608
    %vm1611 = vcmp.lt.s32.totalorder %v1602, %v1608
    %vm1612 = vmand %vm1604, %vm1609
    %vm1613 = vmand %vm1605, %vm1610
    %vm1614 = vmand %vm1606, %vm1611
    %v1615 = vsel %vm1612, %v1594, -1e+30
    %v1616 = vsel %vm1613, %v1595, -1e+30
    %v1617 = vsel %vm1614, %v1596, -1e+30
    %vm1618 = vcmask 523264
    %v1619 = vsel %vm1618, %v1617, -inf
    %v1620 = vmax.f32 %v1615, %v1616
    %v1621 = vmax.f32 %v1620, %v1619
    %1622 = vmax.xlane.f32.xlu0 %v1621
    %v1623 = vpop.xlane.xlu0 %1622
    %v1624 = vsub.f32 %v1615, %v1623
    %v1625 = vsub.f32 %v1616, %v1623
    %v1626 = vsub.f32 %v1617, %v1623
    %v1627 = vmul.f32 %v1624, 1.442695
    %v1628 = vpow.pop %v1627
    %v1629 = vmul.f32 %v1625, 1.442695
    %v1630 = vpow.pop %v1629
    %v1631 = vmul.f32 %v1626, 1.442695
    %v1632 = vpow.pop %v1631
    %v1633 = vadd.f32 %v1628, %v1630
    %v1634 = vsel %vm1618, %v1632, 0.0
    %v1635 = vadd.f32 %v1633, %v1634
    %1636 = vadd.xlane.f32.xlu0 %v1635
    %v1637 = vpop.xlane.xlu0 %1636
    %v1638 = vrcp.pop %v1637
    %v1639 = vmul.f32 %v1628, %v1638
    %v1640 = vmul.f32 %v1630, %v1638
    %v1641 = vmul.f32 %v1632, %v1638
    %v1643 = vsel %vm1618, %v1641, 0
    %1645 = vmatprep.subr.mxu0 0.0
    %v1646 = vand.u32 %v104, 4294901760
    %1647 = vmatpush1.msra.mxu0 %v1646
    %1648 = vmatprep.subr.mxu0 0.0
    %v1649 = vand.u32 %v105, 4294901760
    %1650 = vmatpush1.msra.mxu0 %v1649
    %1651 = vmatprep.subr.mxu0 0.0
    %v1652 = vand.u32 %v106, 4294901760
    %1653 = vmatpush1.msra.mxu0 %v1652
    %1654 = vmatprep.subr.mxu0 0.0
    %v1655 = vand.u32 %v107, 4294901760
    %1656 = vmatpush1.msra.mxu0 %v1655
    %1657 = vmatprep.subr.mxu0 0.0
    %v1658 = vand.u32 %v108, 4294901760
    %1659 = vmatpush1.msra.mxu0 %v1658
    %1660 = vmatprep.subr.mxu0 0.0
    %v1661 = vand.u32 %v109, 4294901760
    %1662 = vmatpush1.msra.mxu0 %v1661
    %1663 = vmatprep.subr.mxu0 0.0
    %v1664 = vand.u32 %v110, 4294901760
    %1665 = vmatpush1.msra.mxu0 %v1664
    %1666 = vmatprep.subr.mxu0 0.0
    %v1667 = vand.u32 %v111, 4294901760
    %1668 = vmatpush1.msra.mxu0 %v1667
    %1669 = vmatprep.subr.mxu0 0.0
    %v1670 = vand.u32 %v112, 4294901760
    %1671 = vmatpush1.msra.mxu0 %v1670
    %1672 = vmatprep.subr.mxu0 0.0
    %v1673 = vand.u32 %v113, 4294901760
    %1674 = vmatpush1.msra.mxu0 %v1673
    %1675 = vmatprep.subr.mxu0 0.0
    %v1676 = vand.u32 %v114, 4294901760
    %1677 = vmatpush1.msra.mxu0 %v1676
    %1678 = vmatprep.subr.mxu0 0.0
    %v1679 = vand.u32 %v115, 4294901760
    %1680 = vmatpush1.msra.mxu0 %v1679
    %1681 = vmatprep.subr.mxu0 0.0
    %v1682 = vand.u32 %v116, 4294901760
    %1683 = vmatpush1.msra.mxu0 %v1682
    %1684 = vmatprep.subr.mxu0 0.0
    %v1685 = vand.u32 %v117, 4294901760
    %1686 = vmatpush1.msra.mxu0 %v1685
    %1687 = vmatprep.subr.mxu0 0.0
    %v1688 = vand.u32 %v118, 4294901760
    %1689 = vmatpush1.msra.mxu0 %v1688
    %1690 = vmatprep.subr.mxu0 0.0
    %v1691 = vand.u32 %v119, 4294901760
    %1692 = vmatpush1.msra.mxu0 %v1691
    %1693 = vmatprep.subr.mxu0 0.0
    %v1694 = vand.u32 %v120, 4294901760
    %1695 = vmatpush1.msra.mxu0 %v1694
    %1696 = vmatprep.subr.mxu0 0.0
    %v1697 = vand.u32 %v121, 4294901760
    %1698 = vmatpush1.msra.mxu0 %v1697
    %1699 = vmatprep.subr.mxu0 0.0
    %v1700 = vand.u32 %v122, 4294901760
    %1701 = vmatpush1.msra.mxu0 %v1700
    %1702 = vmatprep.subr.mxu0 0.0
    %v1703 = vand.u32 %v123, 4294901760
    %1704 = vmatpush1.msra.mxu0 %v1703
    %1705 = vmatprep.subr.mxu0 0.0
    %v1706 = vand.u32 %v124, 4294901760
    %1707 = vmatpush1.msra.mxu0 %v1706
    %1708 = vmatprep.subr.mxu0 0.0
    %v1709 = vand.u32 %v125, 4294901760
    %1710 = vmatpush1.msra.mxu0 %v1709
    %1711 = vmatprep.subr.mxu0 0.0
    %v1712 = vand.u32 %v126, 4294901760
    %1713 = vmatpush1.msra.mxu0 %v1712
    %1714 = vmatprep.subr.mxu0 0.0
    %v1715 = vand.u32 %v127, 4294901760
    %1716 = vmatpush1.msra.mxu0 %v1715
    %1717 = vmatprep.subr.mxu0 0.0
    %v1718 = vand.u32 %v128, 4294901760
    %1719 = vmatpush1.msra.mxu0 %v1718
    %1720 = vmatprep.subr.mxu0 0.0
    %v1721 = vand.u32 %v129, 4294901760
    %1722 = vmatpush1.msra.mxu0 %v1721
    %1723 = vmatprep.subr.mxu0 0.0
    %v1724 = vand.u32 %v130, 4294901760
    %1725 = vmatpush1.msra.mxu0 %v1724
    %1726 = vmatprep.subr.mxu0 0.0
    %v1727 = vand.u32 %v131, 4294901760
    %1728 = vmatpush1.msra.mxu0 %v1727
    %1729 = vmatprep.subr.mxu0 0.0
    %v1730 = vand.u32 %v132, 4294901760
    %1731 = vmatpush1.msra.mxu0 %v1730
    %1732 = vmatprep.subr.mxu0 0.0
    %v1733 = vand.u32 %v133, 4294901760
    %1734 = vmatpush1.msra.mxu0 %v1733
    %1735 = vmatprep.subr.mxu0 0.0
    %v1736 = vand.u32 %v134, 4294901760
    %1737 = vmatpush1.msra.mxu0 %v1736
    %1738 = vmatprep.subr.mxu0 0.0
    %v1739 = vand.u32 %v135, 4294901760
    %1740 = vmatpush1.msra.mxu0 %v1739
    %v1741 = vand.u32 %v1640, 4294901760
    %v1742 = vsub.f32 %v1640, %v1741
    %v1743 = vand.u32 %v1742, 4294901760
    %v1744 = vsub.f32 %v1742, %v1743
    %v1745 = vand.u32 %v1744, 4294901760
    %1746 = vmatprep.mubr.f32.mxu0 %v1745
    %v1747 = vand.u32 %v1639, 4294901760
    %v1748 = vsub.f32 %v1639, %v1747
    %v1749 = vand.u32 %v1748, 4294901760
    %v1750 = vsub.f32 %v1748, %v1749
    %v1751 = vand.u32 %v1750, 4294901760
    %1752 = vmatmul.mubr.f32.gmra.mrb[0].mxu0 %v1751
    %v1753 = vpop.f32.mrb[0].mxu0
    %v1754 = vadd.f32 0.0, %v1753
    %v1755 = vpop.f32.mrb[0].mxu0
    %1756 = vdwg.mxu0
    %1757 = vmatprep.subr.mxu0 0.0
    %v1758 = vand.u32 %v104, 4294901760
    %v1759 = vsub.f32 %v104, %v1758
    %v1760 = vand.u32 %v1759, 4294901760
    %v1761 = vsub.f32 %v1759, %v1760
    %v1762 = vand.u32 %v1761, 4294901760
    %1763 = vmatpush1.msra.mxu0 %v1762
    %1764 = vmatprep.subr.mxu0 0.0
    %v1765 = vand.u32 %v105, 4294901760
    %v1766 = vsub.f32 %v105, %v1765
    %v1767 = vand.u32 %v1766, 4294901760
    %v1768 = vsub.f32 %v1766, %v1767
    %v1769 = vand.u32 %v1768, 4294901760
    %1770 = vmatpush1.msra.mxu0 %v1769
    %1771 = vmatprep.subr.mxu0 0.0
    %v1772 = vand.u32 %v106, 4294901760
    %v1773 = vsub.f32 %v106, %v1772
    %v1774 = vand.u32 %v1773, 4294901760
    %v1775 = vsub.f32 %v1773, %v1774
    %v1776 = vand.u32 %v1775, 4294901760
    %1777 = vmatpush1.msra.mxu0 %v1776
    %1778 = vmatprep.subr.mxu0 0.0
    %v1779 = vand.u32 %v107, 4294901760
    %v1780 = vsub.f32 %v107, %v1779
    %v1781 = vand.u32 %v1780, 4294901760
    %v1782 = vsub.f32 %v1780, %v1781
    %v1783 = vand.u32 %v1782, 4294901760
    %1784 = vmatpush1.msra.mxu0 %v1783
    %1785 = vmatprep.subr.mxu0 0.0
    %v1786 = vand.u32 %v108, 4294901760
    %v1787 = vsub.f32 %v108, %v1786
    %v1788 = vand.u32 %v1787, 4294901760
    %v1789 = vsub.f32 %v1787, %v1788
    %v1790 = vand.u32 %v1789, 4294901760
    %1791 = vmatpush1.msra.mxu0 %v1790
    %1792 = vmatprep.subr.mxu0 0.0
    %v1793 = vand.u32 %v109, 4294901760
    %v1794 = vsub.f32 %v109, %v1793
    %v1795 = vand.u32 %v1794, 4294901760
    %v1796 = vsub.f32 %v1794, %v1795
    %v1797 = vand.u32 %v1796, 4294901760
    %1798 = vmatpush1.msra.mxu0 %v1797
    %1799 = vmatprep.subr.mxu0 0.0
    %v1800 = vand.u32 %v110, 4294901760
    %v1801 = vsub.f32 %v110, %v1800
    %v1802 = vand.u32 %v1801, 4294901760
    %v1803 = vsub.f32 %v1801, %v1802
    %v1804 = vand.u32 %v1803, 4294901760
    %1805 = vmatpush1.msra.mxu0 %v1804
    %1806 = vmatprep.subr.mxu0 0.0
    %v1807 = vand.u32 %v111, 4294901760
    %v1808 = vsub.f32 %v111, %v1807
    %v1809 = vand.u32 %v1808, 4294901760
    %v1810 = vsub.f32 %v1808, %v1809
    %v1811 = vand.u32 %v1810, 4294901760
    %1812 = vmatpush1.msra.mxu0 %v1811
    %1813 = vmatprep.subr.mxu0 0.0
    %v1814 = vand.u32 %v112, 4294901760
    %v1815 = vsub.f32 %v112, %v1814
    %v1816 = vand.u32 %v1815, 4294901760
    %v1817 = vsub.f32 %v1815, %v1816
    %v1818 = vand.u32 %v1817, 4294901760
    %1819 = vmatpush1.msra.mxu0 %v1818
    %1820 = vmatprep.subr.mxu0 0.0
    %v1821 = vand.u32 %v113, 4294901760
    %v1822 = vsub.f32 %v113, %v1821
    %v1823 = vand.u32 %v1822, 4294901760
    %v1824 = vsub.f32 %v1822, %v1823
    %v1825 = vand.u32 %v1824, 4294901760
    %1826 = vmatpush1.msra.mxu0 %v1825
    %1827 = vmatprep.subr.mxu0 0.0
    %v1828 = vand.u32 %v114, 4294901760
    %v1829 = vsub.f32 %v114, %v1828
    %v1830 = vand.u32 %v1829, 4294901760
    %v1831 = vsub.f32 %v1829, %v1830
    %v1832 = vand.u32 %v1831, 4294901760
    %1833 = vmatpush1.msra.mxu0 %v1832
    %1834 = vmatprep.subr.mxu0 0.0
    %v1835 = vand.u32 %v115, 4294901760
    %v1836 = vsub.f32 %v115, %v1835
    %v1837 = vand.u32 %v1836, 4294901760
    %v1838 = vsub.f32 %v1836, %v1837
    %v1839 = vand.u32 %v1838, 4294901760
    %1840 = vmatpush1.msra.mxu0 %v1839
    %1841 = vmatprep.subr.mxu0 0.0
    %v1842 = vand.u32 %v116, 4294901760
    %v1843 = vsub.f32 %v116, %v1842
    %v1844 = vand.u32 %v1843, 4294901760
    %v1845 = vsub.f32 %v1843, %v1844
    %v1846 = vand.u32 %v1845, 4294901760
    %1847 = vmatpush1.msra.mxu0 %v1846
    %1848 = vmatprep.subr.mxu0 0.0
    %v1849 = vand.u32 %v117, 4294901760
    %v1850 = vsub.f32 %v117, %v1849
    %v1851 = vand.u32 %v1850, 4294901760
    %v1852 = vsub.f32 %v1850, %v1851
    %v1853 = vand.u32 %v1852, 4294901760
    %1854 = vmatpush1.msra.mxu0 %v1853
    %1855 = vmatprep.subr.mxu0 0.0
    %v1856 = vand.u32 %v118, 4294901760
    %v1857 = vsub.f32 %v118, %v1856
    %v1858 = vand.u32 %v1857, 4294901760
    %v1859 = vsub.f32 %v1857, %v1858
    %v1860 = vand.u32 %v1859, 4294901760
    %1861 = vmatpush1.msra.mxu0 %v1860
    %1862 = vmatprep.subr.mxu0 0.0
    %v1863 = vand.u32 %v119, 4294901760
    %v1864 = vsub.f32 %v119, %v1863
    %v1865 = vand.u32 %v1864, 4294901760
    %v1866 = vsub.f32 %v1864, %v1865
    %v1867 = vand.u32 %v1866, 4294901760
    %1868 = vmatpush1.msra.mxu0 %v1867
    %1869 = vmatprep.subr.mxu0 0.0
    %v1870 = vand.u32 %v120, 4294901760
    %v1871 = vsub.f32 %v120, %v1870
    %v1872 = vand.u32 %v1871, 4294901760
    %v1873 = vsub.f32 %v1871, %v1872
    %v1874 = vand.u32 %v1873, 4294901760
    %1875 = vmatpush1.msra.mxu0 %v1874
    %1876 = vmatprep.subr.mxu0 0.0
    %v1877 = vand.u32 %v121, 4294901760
    %v1878 = vsub.f32 %v121, %v1877
    %v1879 = vand.u32 %v1878, 4294901760
    %v1880 = vsub.f32 %v1878, %v1879
    %v1881 = vand.u32 %v1880, 4294901760
    %1882 = vmatpush1.msra.mxu0 %v1881
    %1883 = vmatprep.subr.mxu0 0.0
    %v1884 = vand.u32 %v122, 4294901760
    %v1885 = vsub.f32 %v122, %v1884
    %v1886 = vand.u32 %v1885, 4294901760
    %v1887 = vsub.f32 %v1885, %v1886
    %v1888 = vand.u32 %v1887, 4294901760
    %1889 = vmatpush1.msra.mxu0 %v1888
    %1890 = vmatprep.subr.mxu0 0.0
    %v1891 = vand.u32 %v123, 4294901760
    %v1892 = vsub.f32 %v123, %v1891
    %v1893 = vand.u32 %v1892, 4294901760
    %v1894 = vsub.f32 %v1892, %v1893
    %v1895 = vand.u32 %v1894, 4294901760
    %1896 = vmatpush1.msra.mxu0 %v1895
    %1897 = vmatprep.subr.mxu0 0.0
    %v1898 = vand.u32 %v124, 4294901760
    %v1899 = vsub.f32 %v124, %v1898
    %v1900 = vand.u32 %v1899, 4294901760
    %v1901 = vsub.f32 %v1899, %v1900
    %v1902 = vand.u32 %v1901, 4294901760
    %1903 = vmatpush1.msra.mxu0 %v1902
    %1904 = vmatprep.subr.mxu0 0.0
    %v1905 = vand.u32 %v125, 4294901760
    %v1906 = vsub.f32 %v125, %v1905
    %v1907 = vand.u32 %v1906, 4294901760
    %v1908 = vsub.f32 %v1906, %v1907
    %v1909 = vand.u32 %v1908, 4294901760
    %1910 = vmatpush1.msra.mxu0 %v1909
    %1911 = vmatprep.subr.mxu0 0.0
    %v1912 = vand.u32 %v126, 4294901760
    %v1913 = vsub.f32 %v126, %v1912
    %v1914 = vand.u32 %v1913, 4294901760
    %v1915 = vsub.f32 %v1913, %v1914
    %v1916 = vand.u32 %v1915, 4294901760
    %1917 = vmatpush1.msra.mxu0 %v1916
    %1918 = vmatprep.subr.mxu0 0.0
    %v1919 = vand.u32 %v127, 4294901760
    %v1920 = vsub.f32 %v127, %v1919
    %v1921 = vand.u32 %v1920, 4294901760
    %v1922 = vsub.f32 %v1920, %v1921
    %v1923 = vand.u32 %v1922, 4294901760
    %1924 = vmatpush1.msra.mxu0 %v1923
    %1925 = vmatprep.subr.mxu0 0.0
    %v1926 = vand.u32 %v128, 4294901760
    %v1927 = vsub.f32 %v128, %v1926
    %v1928 = vand.u32 %v1927, 4294901760
    %v1929 = vsub.f32 %v1927, %v1928
    %v1930 = vand.u32 %v1929, 4294901760
    %1931 = vmatpush1.msra.mxu0 %v1930
    %1932 = vmatprep.subr.mxu0 0.0
    %v1933 = vand.u32 %v129, 4294901760
    %v1934 = vsub.f32 %v129, %v1933
    %v1935 = vand.u32 %v1934, 4294901760
    %v1936 = vsub.f32 %v1934, %v1935
    %v1937 = vand.u32 %v1936, 4294901760
    %1938 = vmatpush1.msra.mxu0 %v1937
    %1939 = vmatprep.subr.mxu0 0.0
    %v1940 = vand.u32 %v130, 4294901760
    %v1941 = vsub.f32 %v130, %v1940
    %v1942 = vand.u32 %v1941, 4294901760
    %v1943 = vsub.f32 %v1941, %v1942
    %v1944 = vand.u32 %v1943, 4294901760
    %1945 = vmatpush1.msra.mxu0 %v1944
    %1946 = vmatprep.subr.mxu0 0.0
    %v1947 = vand.u32 %v131, 4294901760
    %v1948 = vsub.f32 %v131, %v1947
    %v1949 = vand.u32 %v1948, 4294901760
    %v1950 = vsub.f32 %v1948, %v1949
    %v1951 = vand.u32 %v1950, 4294901760
    %1952 = vmatpush1.msra.mxu0 %v1951
    %1953 = vmatprep.subr.mxu0 0.0
    %v1954 = vand.u32 %v132, 4294901760
    %v1955 = vsub.f32 %v132, %v1954
    %v1956 = vand.u32 %v1955, 4294901760
    %v1957 = vsub.f32 %v1955, %v1956
    %v1958 = vand.u32 %v1957, 4294901760
    %1959 = vmatpush1.msra.mxu0 %v1958
    %1960 = vmatprep.subr.mxu0 0.0
    %v1961 = vand.u32 %v133, 4294901760
    %v1962 = vsub.f32 %v133, %v1961
    %v1963 = vand.u32 %v1962, 4294901760
    %v1964 = vsub.f32 %v1962, %v1963
    %v1965 = vand.u32 %v1964, 4294901760
    %1966 = vmatpush1.msra.mxu0 %v1965
    %1967 = vmatprep.subr.mxu0 0.0
    %v1968 = vand.u32 %v134, 4294901760
    %v1969 = vsub.f32 %v134, %v1968
    %v1970 = vand.u32 %v1969, 4294901760
    %v1971 = vsub.f32 %v1969, %v1970
    %v1972 = vand.u32 %v1971, 4294901760
    %1973 = vmatpush1.msra.mxu0 %v1972
    %1974 = vmatprep.subr.mxu0 0.0
    %v1975 = vand.u32 %v135, 4294901760
    %v1976 = vsub.f32 %v135, %v1975
    %v1977 = vand.u32 %v1976, 4294901760
    %v1978 = vsub.f32 %v1976, %v1977
    %v1979 = vand.u32 %v1978, 4294901760
    %1980 = vmatpush1.msra.mxu0 %v1979
    %v1981 = vand.u32 %v1640, 4294901760
    %1982 = vmatprep.mubr.f32.mxu0 %v1981
    %v1983 = vand.u32 %v1639, 4294901760
    %1984 = vmatmul.mubr.f32.gmra.mrb[0].mxu0 %v1983
    %v1985 = vpop.f32.mrb[0].mxu0
    %v1986 = vadd.f32 %v1754, %v1985
    %v1987 = vpop.f32.mrb[0].mxu0
    %1988 = vdwg.mxu0
    %1989 = vmatprep.subr.mxu0 0.0
    %v1990 = vand.u32 %v104, 4294901760
    %v1991 = vsub.f32 %v104, %v1990
    %1992 = vmatpush1.msra.mxu0 %v1991
    %1993 = vmatprep.subr.mxu0 0.0
    %v1994 = vand.u32 %v105, 4294901760
    %v1995 = vsub.f32 %v105, %v1994
    %1996 = vmatpush1.msra.mxu0 %v1995
    %1997 = vmatprep.subr.mxu0 0.0
    %v1998 = vand.u32 %v106, 4294901760
    %v1999 = vsub.f32 %v106, %v1998
    %2000 = vmatpush1.msra.mxu0 %v1999
    %2001 = vmatprep.subr.mxu0 0.0
    %v2002 = vand.u32 %v107, 4294901760
    %v2003 = vsub.f32 %v107, %v2002
    %2004 = vmatpush1.msra.mxu0 %v2003
    %2005 = vmatprep.subr.mxu0 0.0
    %v2006 = vand.u32 %v108, 4294901760
    %v2007 = vsub.f32 %v108, %v2006
    %2008 = vmatpush1.msra.mxu0 %v2007
    %2009 = vmatprep.subr.mxu0 0.0
    %v2010 = vand.u32 %v109, 4294901760
    %v2011 = vsub.f32 %v109, %v2010
    %2012 = vmatpush1.msra.mxu0 %v2011
    %2013 = vmatprep.subr.mxu0 0.0
    %v2014 = vand.u32 %v110, 4294901760
    %v2015 = vsub.f32 %v110, %v2014
    %2016 = vmatpush1.msra.mxu0 %v2015
    %2017 = vmatprep.subr.mxu0 0.0
    %v2018 = vand.u32 %v111, 4294901760
    %v2019 = vsub.f32 %v111, %v2018
    %2020 = vmatpush1.msra.mxu0 %v2019
    %2021 = vmatprep.subr.mxu0 0.0
    %v2022 = vand.u32 %v112, 4294901760
    %v2023 = vsub.f32 %v112, %v2022
    %2024 = vmatpush1.msra.mxu0 %v2023
    %2025 = vmatprep.subr.mxu0 0.0
    %v2026 = vand.u32 %v113, 4294901760
    %v2027 = vsub.f32 %v113, %v2026
    %2028 = vmatpush1.msra.mxu0 %v2027
    %2029 = vmatprep.subr.mxu0 0.0
    %v2030 = vand.u32 %v114, 4294901760
    %v2031 = vsub.f32 %v114, %v2030
    %2032 = vmatpush1.msra.mxu0 %v2031
    %2033 = vmatprep.subr.mxu0 0.0
    %v2034 = vand.u32 %v115, 4294901760
    %v2035 = vsub.f32 %v115, %v2034
    %2036 = vmatpush1.msra.mxu0 %v2035
    %2037 = vmatprep.subr.mxu0 0.0
    %v2038 = vand.u32 %v116, 4294901760
    %v2039 = vsub.f32 %v116, %v2038
    %2040 = vmatpush1.msra.mxu0 %v2039
    %2041 = vmatprep.subr.mxu0 0.0
    %v2042 = vand.u32 %v117, 4294901760
    %v2043 = vsub.f32 %v117, %v2042
    %2044 = vmatpush1.msra.mxu0 %v2043
    %2045 = vmatprep.subr.mxu0 0.0
    %v2046 = vand.u32 %v118, 4294901760
    %v2047 = vsub.f32 %v118, %v2046
    %2048 = vmatpush1.msra.mxu0 %v2047
    %2049 = vmatprep.subr.mxu0 0.0
    %v2050 = vand.u32 %v119, 4294901760
    %v2051 = vsub.f32 %v119, %v2050
    %2052 = vmatpush1.msra.mxu0 %v2051
    %2053 = vmatprep.subr.mxu0 0.0
    %v2054 = vand.u32 %v120, 4294901760
    %v2055 = vsub.f32 %v120, %v2054
    %2056 = vmatpush1.msra.mxu0 %v2055
    %2057 = vmatprep.subr.mxu0 0.0
    %v2058 = vand.u32 %v121, 4294901760
    %v2059 = vsub.f32 %v121, %v2058
    %2060 = vmatpush1.msra.mxu0 %v2059
    %2061 = vmatprep.subr.mxu0 0.0
    %v2062 = vand.u32 %v122, 4294901760
    %v2063 = vsub.f32 %v122, %v2062
    %2064 = vmatpush1.msra.mxu0 %v2063
    %2065 = vmatprep.subr.mxu0 0.0
    %v2066 = vand.u32 %v123, 4294901760
    %v2067 = vsub.f32 %v123, %v2066
    %2068 = vmatpush1.msra.mxu0 %v2067
    %2069 = vmatprep.subr.mxu0 0.0
    %v2070 = vand.u32 %v124, 4294901760
    %v2071 = vsub.f32 %v124, %v2070
    %2072 = vmatpush1.msra.mxu0 %v2071
    %2073 = vmatprep.subr.mxu0 0.0
    %v2074 = vand.u32 %v125, 4294901760
    %v2075 = vsub.f32 %v125, %v2074
    %2076 = vmatpush1.msra.mxu0 %v2075
    %2077 = vmatprep.subr.mxu0 0.0
    %v2078 = vand.u32 %v126, 4294901760
    %v2079 = vsub.f32 %v126, %v2078
    %2080 = vmatpush1.msra.mxu0 %v2079
    %2081 = vmatprep.subr.mxu0 0.0
    %v2082 = vand.u32 %v127, 4294901760
    %v2083 = vsub.f32 %v127, %v2082
    %2084 = vmatpush1.msra.mxu0 %v2083
    %2085 = vmatprep.subr.mxu0 0.0
    %v2086 = vand.u32 %v128, 4294901760
    %v2087 = vsub.f32 %v128, %v2086
    %2088 = vmatpush1.msra.mxu0 %v2087
    %2089 = vmatprep.subr.mxu0 0.0
    %v2090 = vand.u32 %v129, 4294901760
    %v2091 = vsub.f32 %v129, %v2090
    %2092 = vmatpush1.msra.mxu0 %v2091
    %2093 = vmatprep.subr.mxu0 0.0
    %v2094 = vand.u32 %v130, 4294901760
    %v2095 = vsub.f32 %v130, %v2094
    %2096 = vmatpush1.msra.mxu0 %v2095
    %2097 = vmatprep.subr.mxu0 0.0
    %v2098 = vand.u32 %v131, 4294901760
    %v2099 = vsub.f32 %v131, %v2098
    %2100 = vmatpush1.msra.mxu0 %v2099
    %2101 = vmatprep.subr.mxu0 0.0
    %v2102 = vand.u32 %v132, 4294901760
    %v2103 = vsub.f32 %v132, %v2102
    %2104 = vmatpush1.msra.mxu0 %v2103
    %2105 = vmatprep.subr.mxu0 0.0
    %v2106 = vand.u32 %v133, 4294901760
    %v2107 = vsub.f32 %v133, %v2106
    %2108 = vmatpush1.msra.mxu0 %v2107
    %2109 = vmatprep.subr.mxu0 0.0
    %v2110 = vand.u32 %v134, 4294901760
    %v2111 = vsub.f32 %v134, %v2110
    %2112 = vmatpush1.msra.mxu0 %v2111
    %2113 = vmatprep.subr.mxu0 0.0
    %v2114 = vand.u32 %v135, 4294901760
    %v2115 = vsub.f32 %v135, %v2114
    %2116 = vmatpush1.msra.mxu0 %v2115
    %v2117 = vand.u32 %v1640, 4294901760
    %v2118 = vsub.f32 %v1640, %v2117
    %2119 = vmatprep.mubr.f32.mxu0 %v2118
    %v2120 = vand.u32 %v1639, 4294901760
    %v2121 = vsub.f32 %v1639, %v2120
    %2122 = vmatmul.mubr.f32.gmra.mrb[0].mxu0 %v2121
    %v2123 = vpop.f32.mrb[0].mxu0
    %v2124 = vadd.f32 %v1986, %v2123
    %v2125 = vpop.f32.mrb[0].mxu0
    %2126 = vdwg.mxu0
    %2127 = vmatprep.subr.mxu0 0.0
    %v2128 = vand.u32 %v104, 4294901760
    %2129 = vmatpush1.msra.mxu0 %v2128
    %2130 = vmatprep.subr.mxu0 0.0
    %v2131 = vand.u32 %v105, 4294901760
    %2132 = vmatpush1.msra.mxu0 %v2131
    %2133 = vmatprep.subr.mxu0 0.0
    %v2134 = vand.u32 %v106, 4294901760
    %2135 = vmatpush1.msra.mxu0 %v2134
    %2136 = vmatprep.subr.mxu0 0.0
    %v2137 = vand.u32 %v107, 4294901760
    %2138 = vmatpush1.msra.mxu0 %v2137
    %2139 = vmatprep.subr.mxu0 0.0
    %v2140 = vand.u32 %v108, 4294901760
    %2141 = vmatpush1.msra.mxu0 %v2140
    %2142 = vmatprep.subr.mxu0 0.0
    %v2143 = vand.u32 %v109, 4294901760
    %2144 = vmatpush1.msra.mxu0 %v2143
    %2145 = vmatprep.subr.mxu0 0.0
    %v2146 = vand.u32 %v110, 4294901760
    %2147 = vmatpush1.msra.mxu0 %v2146
    %2148 = vmatprep.subr.mxu0 0.0
    %v2149 = vand.u32 %v111, 4294901760
    %2150 = vmatpush1.msra.mxu0 %v2149
    %2151 = vmatprep.subr.mxu0 0.0
    %v2152 = vand.u32 %v112, 4294901760
    %2153 = vmatpush1.msra.mxu0 %v2152
    %2154 = vmatprep.subr.mxu0 0.0
    %v2155 = vand.u32 %v113, 4294901760
    %2156 = vmatpush1.msra.mxu0 %v2155
    %2157 = vmatprep.subr.mxu0 0.0
    %v2158 = vand.u32 %v114, 4294901760
    %2159 = vmatpush1.msra.mxu0 %v2158
    %2160 = vmatprep.subr.mxu0 0.0
    %v2161 = vand.u32 %v115, 4294901760
    %2162 = vmatpush1.msra.mxu0 %v2161
    %2163 = vmatprep.subr.mxu0 0.0
    %v2164 = vand.u32 %v116, 4294901760
    %2165 = vmatpush1.msra.mxu0 %v2164
    %2166 = vmatprep.subr.mxu0 0.0
    %v2167 = vand.u32 %v117, 4294901760
    %2168 = vmatpush1.msra.mxu0 %v2167
    %2169 = vmatprep.subr.mxu0 0.0
    %v2170 = vand.u32 %v118, 4294901760
    %2171 = vmatpush1.msra.mxu0 %v2170
    %2172 = vmatprep.subr.mxu0 0.0
    %v2173 = vand.u32 %v119, 4294901760
    %2174 = vmatpush1.msra.mxu0 %v2173
    %2175 = vmatprep.subr.mxu0 0.0
    %v2176 = vand.u32 %v120, 4294901760
    %2177 = vmatpush1.msra.mxu0 %v2176
    %2178 = vmatprep.subr.mxu0 0.0
    %v2179 = vand.u32 %v121, 4294901760
    %2180 = vmatpush1.msra.mxu0 %v2179
    %2181 = vmatprep.subr.mxu0 0.0
    %v2182 = vand.u32 %v122, 4294901760
    %2183 = vmatpush1.msra.mxu0 %v2182
    %2184 = vmatprep.subr.mxu0 0.0
    %v2185 = vand.u32 %v123, 4294901760
    %2186 = vmatpush1.msra.mxu0 %v2185
    %2187 = vmatprep.subr.mxu0 0.0
    %v2188 = vand.u32 %v124, 4294901760
    %2189 = vmatpush1.msra.mxu0 %v2188
    %2190 = vmatprep.subr.mxu0 0.0
    %v2191 = vand.u32 %v125, 4294901760
    %2192 = vmatpush1.msra.mxu0 %v2191
    %2193 = vmatprep.subr.mxu0 0.0
    %v2194 = vand.u32 %v126, 4294901760
    %2195 = vmatpush1.msra.mxu0 %v2194
    %2196 = vmatprep.subr.mxu0 0.0
    %v2197 = vand.u32 %v127, 4294901760
    %2198 = vmatpush1.msra.mxu0 %v2197
    %2199 = vmatprep.subr.mxu0 0.0
    %v2200 = vand.u32 %v128, 4294901760
    %2201 = vmatpush1.msra.mxu0 %v2200
    %2202 = vmatprep.subr.mxu0 0.0
    %v2203 = vand.u32 %v129, 4294901760
    %2204 = vmatpush1.msra.mxu0 %v2203
    %2205 = vmatprep.subr.mxu0 0.0
    %v2206 = vand.u32 %v130, 4294901760
    %2207 = vmatpush1.msra.mxu0 %v2206
    %2208 = vmatprep.subr.mxu0 0.0
    %v2209 = vand.u32 %v131, 4294901760
    %2210 = vmatpush1.msra.mxu0 %v2209
    %2211 = vmatprep.subr.mxu0 0.0
    %v2212 = vand.u32 %v132, 4294901760
    %2213 = vmatpush1.msra.mxu0 %v2212
    %2214 = vmatprep.subr.mxu0 0.0
    %v2215 = vand.u32 %v133, 4294901760
    %2216 = vmatpush1.msra.mxu0 %v2215
    %2217 = vmatprep.subr.mxu0 0.0
    %v2218 = vand.u32 %v134, 4294901760
    %2219 = vmatpush1.msra.mxu0 %v2218
    %2220 = vmatprep.subr.mxu0 0.0
    %v2221 = vand.u32 %v135, 4294901760
    %2222 = vmatpush1.msra.mxu0 %v2221
    %v2223 = vand.u32 %v1640, 4294901760
    %v2224 = vsub.f32 %v1640, %v2223
    %v2225 = vand.u32 %v2224, 4294901760
    %2226 = vmatprep.mubr.f32.mxu0 %v2225
    %v2227 = vand.u32 %v1639, 4294901760
    %v2228 = vsub.f32 %v1639, %v2227
    %v2229 = vand.u32 %v2228, 4294901760
    %2230 = vmatmul.mubr.f32.gmra.mrb[0].mxu0 %v2229
    %v2231 = vpop.f32.mrb[0].mxu0
    %v2232 = vadd.f32 %v2124, %v2231
    %v2233 = vpop.f32.mrb[0].mxu0
    %2234 = vdwg.mxu0
    %2235 = vmatprep.subr.mxu0 0.0
    %v2236 = vand.u32 %v104, 4294901760
    %v2237 = vsub.f32 %v104, %v2236
    %v2238 = vand.u32 %v2237, 4294901760
    %2239 = vmatpush1.msra.mxu0 %v2238
    %2240 = vmatprep.subr.mxu0 0.0
    %v2241 = vand.u32 %v105, 4294901760
    %v2242 = vsub.f32 %v105, %v2241
    %v2243 = vand.u32 %v2242, 4294901760
    %2244 = vmatpush1.msra.mxu0 %v2243
    %2245 = vmatprep.subr.mxu0 0.0
    %v2246 = vand.u32 %v106, 4294901760
    %v2247 = vsub.f32 %v106, %v2246
    %v2248 = vand.u32 %v2247, 4294901760
    %2249 = vmatpush1.msra.mxu0 %v2248
    %2250 = vmatprep.subr.mxu0 0.0
    %v2251 = vand.u32 %v107, 4294901760
    %v2252 = vsub.f32 %v107, %v2251
    %v2253 = vand.u32 %v2252, 4294901760
    %2254 = vmatpush1.msra.mxu0 %v2253
    %2255 = vmatprep.subr.mxu0 0.0
    %v2256 = vand.u32 %v108, 4294901760
    %v2257 = vsub.f32 %v108, %v2256
    %v2258 = vand.u32 %v2257, 4294901760
    %2259 = vmatpush1.msra.mxu0 %v2258
    %2260 = vmatprep.subr.mxu0 0.0
    %v2261 = vand.u32 %v109, 4294901760
    %v2262 = vsub.f32 %v109, %v2261
    %v2263 = vand.u32 %v2262, 4294901760
    %2264 = vmatpush1.msra.mxu0 %v2263
    %2265 = vmatprep.subr.mxu0 0.0
    %v2266 = vand.u32 %v110, 4294901760
    %v2267 = vsub.f32 %v110, %v2266
    %v2268 = vand.u32 %v2267, 4294901760
    %2269 = vmatpush1.msra.mxu0 %v2268
    %2270 = vmatprep.subr.mxu0 0.0
    %v2271 = vand.u32 %v111, 4294901760
    %v2272 = vsub.f32 %v111, %v2271
    %v2273 = vand.u32 %v2272, 4294901760
    %2274 = vmatpush1.msra.mxu0 %v2273
    %2275 = vmatprep.subr.mxu0 0.0
    %v2276 = vand.u32 %v112, 4294901760
    %v2277 = vsub.f32 %v112, %v2276
    %v2278 = vand.u32 %v2277, 4294901760
    %2279 = vmatpush1.msra.mxu0 %v2278
    %2280 = vmatprep.subr.mxu0 0.0
    %v2281 = vand.u32 %v113, 4294901760
    %v2282 = vsub.f32 %v113, %v2281
    %v2283 = vand.u32 %v2282, 4294901760
    %2284 = vmatpush1.msra.mxu0 %v2283
    %2285 = vmatprep.subr.mxu0 0.0
    %v2286 = vand.u32 %v114, 4294901760
    %v2287 = vsub.f32 %v114, %v2286
    %v2288 = vand.u32 %v2287, 4294901760
    %2289 = vmatpush1.msra.mxu0 %v2288
    %2290 = vmatprep.subr.mxu0 0.0
    %v2291 = vand.u32 %v115, 4294901760
    %v2292 = vsub.f32 %v115, %v2291
    %v2293 = vand.u32 %v2292, 4294901760
    %2294 = vmatpush1.msra.mxu0 %v2293
    %2295 = vmatprep.subr.mxu0 0.0
    %v2296 = vand.u32 %v116, 4294901760
    %v2297 = vsub.f32 %v116, %v2296
    %v2298 = vand.u32 %v2297, 4294901760
    %2299 = vmatpush1.msra.mxu0 %v2298
    %2300 = vmatprep.subr.mxu0 0.0
    %v2301 = vand.u32 %v117, 4294901760
    %v2302 = vsub.f32 %v117, %v2301
    %v2303 = vand.u32 %v2302, 4294901760
    %2304 = vmatpush1.msra.mxu0 %v2303
    %2305 = vmatprep.subr.mxu0 0.0
    %v2306 = vand.u32 %v118, 4294901760
    %v2307 = vsub.f32 %v118, %v2306
    %v2308 = vand.u32 %v2307, 4294901760
    %2309 = vmatpush1.msra.mxu0 %v2308
    %2310 = vmatprep.subr.mxu0 0.0
    %v2311 = vand.u32 %v119, 4294901760
    %v2312 = vsub.f32 %v119, %v2311
    %v2313 = vand.u32 %v2312, 4294901760
    %2314 = vmatpush1.msra.mxu0 %v2313
    %2315 = vmatprep.subr.mxu0 0.0
    %v2316 = vand.u32 %v120, 4294901760
    %v2317 = vsub.f32 %v120, %v2316
    %v2318 = vand.u32 %v2317, 4294901760
    %2319 = vmatpush1.msra.mxu0 %v2318
    %2320 = vmatprep.subr.mxu0 0.0
    %v2321 = vand.u32 %v121, 4294901760
    %v2322 = vsub.f32 %v121, %v2321
    %v2323 = vand.u32 %v2322, 4294901760
    %2324 = vmatpush1.msra.mxu0 %v2323
    %2325 = vmatprep.subr.mxu0 0.0
    %v2326 = vand.u32 %v122, 4294901760
    %v2327 = vsub.f32 %v122, %v2326
    %v2328 = vand.u32 %v2327, 4294901760
    %2329 = vmatpush1.msra.mxu0 %v2328
    %2330 = vmatprep.subr.mxu0 0.0
    %v2331 = vand.u32 %v123, 4294901760
    %v2332 = vsub.f32 %v123, %v2331
    %v2333 = vand.u32 %v2332, 4294901760
    %2334 = vmatpush1.msra.mxu0 %v2333
    %2335 = vmatprep.subr.mxu0 0.0
    %v2336 = vand.u32 %v124, 4294901760
    %v2337 = vsub.f32 %v124, %v2336
    %v2338 = vand.u32 %v2337, 4294901760
    %2339 = vmatpush1.msra.mxu0 %v2338
    %2340 = vmatprep.subr.mxu0 0.0
    %v2341 = vand.u32 %v125, 4294901760
    %v2342 = vsub.f32 %v125, %v2341
    %v2343 = vand.u32 %v2342, 4294901760
    %2344 = vmatpush1.msra.mxu0 %v2343
    %2345 = vmatprep.subr.mxu0 0.0
    %v2346 = vand.u32 %v126, 4294901760
    %v2347 = vsub.f32 %v126, %v2346
    %v2348 = vand.u32 %v2347, 4294901760
    %2349 = vmatpush1.msra.mxu0 %v2348
    %2350 = vmatprep.subr.mxu0 0.0
    %v2351 = vand.u32 %v127, 4294901760
    %v2352 = vsub.f32 %v127, %v2351
    %v2353 = vand.u32 %v2352, 4294901760
    %2354 = vmatpush1.msra.mxu0 %v2353
    %2355 = vmatprep.subr.mxu0 0.0
    %v2356 = vand.u32 %v128, 4294901760
    %v2357 = vsub.f32 %v128, %v2356
    %v2358 = vand.u32 %v2357, 4294901760
    %2359 = vmatpush1.msra.mxu0 %v2358
    %2360 = vmatprep.subr.mxu0 0.0
    %v2361 = vand.u32 %v129, 4294901760
    %v2362 = vsub.f32 %v129, %v2361
    %v2363 = vand.u32 %v2362, 4294901760
    %2364 = vmatpush1.msra.mxu0 %v2363
    %2365 = vmatprep.subr.mxu0 0.0
    %v2366 = vand.u32 %v130, 4294901760
    %v2367 = vsub.f32 %v130, %v2366
    %v2368 = vand.u32 %v2367, 4294901760
    %2369 = vmatpush1.msra.mxu0 %v2368
    %2370 = vmatprep.subr.mxu0 0.0
    %v2371 = vand.u32 %v131, 4294901760
    %v2372 = vsub.f32 %v131, %v2371
    %v2373 = vand.u32 %v2372, 4294901760
    %2374 = vmatpush1.msra.mxu0 %v2373
    %2375 = vmatprep.subr.mxu0 0.0
    %v2376 = vand.u32 %v132, 4294901760
    %v2377 = vsub.f32 %v132, %v2376
    %v2378 = vand.u32 %v2377, 4294901760
    %2379 = vmatpush1.msra.mxu0 %v2378
    %2380 = vmatprep.subr.mxu0 0.0
    %v2381 = vand.u32 %v133, 4294901760
    %v2382 = vsub.f32 %v133, %v2381
    %v2383 = vand.u32 %v2382, 4294901760
    %2384 = vmatpush1.msra.mxu0 %v2383
    %2385 = vmatprep.subr.mxu0 0.0
    %v2386 = vand.u32 %v134, 4294901760
    %v2387 = vsub.f32 %v134, %v2386
    %v2388 = vand.u32 %v2387, 4294901760
    %2389 = vmatpush1.msra.mxu0 %v2388
    %2390 = vmatprep.subr.mxu0 0.0
    %v2391 = vand.u32 %v135, 4294901760
    %v2392 = vsub.f32 %v135, %v2391
    %v2393 = vand.u32 %v2392, 4294901760
    %2394 = vmatpush1.msra.mxu0 %v2393
    %v2395 = vand.u32 %v1640, 4294901760
    %2396 = vmatprep.mubr.f32.mxu0 %v2395
    %v2397 = vand.u32 %v1639, 4294901760
    %2398 = vmatmul.mubr.f32.gmra.mrb[0].mxu0 %v2397
    %v2399 = vpop.f32.mrb[0].mxu0
    %v2400 = vadd.f32 %v2232, %v2399
    %v2401 = vpop.f32.mrb[0].mxu0
    %2402 = vdwg.mxu0
    %2403 = vmatprep.subr.mxu0 0.0
    %v2404 = vand.u32 %v104, 4294901760
    %2405 = vmatpush1.msra.mxu0 %v2404
    %2406 = vmatprep.subr.mxu0 0.0
    %v2407 = vand.u32 %v105, 4294901760
    %2408 = vmatpush1.msra.mxu0 %v2407
    %2409 = vmatprep.subr.mxu0 0.0
    %v2410 = vand.u32 %v106, 4294901760
    %2411 = vmatpush1.msra.mxu0 %v2410
    %2412 = vmatprep.subr.mxu0 0.0
    %v2413 = vand.u32 %v107, 4294901760
    %2414 = vmatpush1.msra.mxu0 %v2413
    %2415 = vmatprep.subr.mxu0 0.0
    %v2416 = vand.u32 %v108, 4294901760
    %2417 = vmatpush1.msra.mxu0 %v2416
    %2418 = vmatprep.subr.mxu0 0.0
    %v2419 = vand.u32 %v109, 4294901760
    %2420 = vmatpush1.msra.mxu0 %v2419
    %2421 = vmatprep.subr.mxu0 0.0
    %v2422 = vand.u32 %v110, 4294901760
    %2423 = vmatpush1.msra.mxu0 %v2422
    %2424 = vmatprep.subr.mxu0 0.0
    %v2425 = vand.u32 %v111, 4294901760
    %2426 = vmatpush1.msra.mxu0 %v2425
    %2427 = vmatprep.subr.mxu0 0.0
    %v2428 = vand.u32 %v112, 4294901760
    %2429 = vmatpush1.msra.mxu0 %v2428
    %2430 = vmatprep.subr.mxu0 0.0
    %v2431 = vand.u32 %v113, 4294901760
    %2432 = vmatpush1.msra.mxu0 %v2431
    %2433 = vmatprep.subr.mxu0 0.0
    %v2434 = vand.u32 %v114, 4294901760
    %2435 = vmatpush1.msra.mxu0 %v2434
    %2436 = vmatprep.subr.mxu0 0.0
    %v2437 = vand.u32 %v115, 4294901760
    %2438 = vmatpush1.msra.mxu0 %v2437
    %2439 = vmatprep.subr.mxu0 0.0
    %v2440 = vand.u32 %v116, 4294901760
    %2441 = vmatpush1.msra.mxu0 %v2440
    %2442 = vmatprep.subr.mxu0 0.0
    %v2443 = vand.u32 %v117, 4294901760
    %2444 = vmatpush1.msra.mxu0 %v2443
    %2445 = vmatprep.subr.mxu0 0.0
    %v2446 = vand.u32 %v118, 4294901760
    %2447 = vmatpush1.msra.mxu0 %v2446
    %2448 = vmatprep.subr.mxu0 0.0
    %v2449 = vand.u32 %v119, 4294901760
    %2450 = vmatpush1.msra.mxu0 %v2449
    %2451 = vmatprep.subr.mxu0 0.0
    %v2452 = vand.u32 %v120, 4294901760
    %2453 = vmatpush1.msra.mxu0 %v2452
    %2454 = vmatprep.subr.mxu0 0.0
    %v2455 = vand.u32 %v121, 4294901760
    %2456 = vmatpush1.msra.mxu0 %v2455
    %2457 = vmatprep.subr.mxu0 0.0
    %v2458 = vand.u32 %v122, 4294901760
    %2459 = vmatpush1.msra.mxu0 %v2458
    %2460 = vmatprep.subr.mxu0 0.0
    %v2461 = vand.u32 %v123, 4294901760
    %2462 = vmatpush1.msra.mxu0 %v2461
    %2463 = vmatprep.subr.mxu0 0.0
    %v2464 = vand.u32 %v124, 4294901760
    %2465 = vmatpush1.msra.mxu0 %v2464
    %2466 = vmatprep.subr.mxu0 0.0
    %v2467 = vand.u32 %v125, 4294901760
    %2468 = vmatpush1.msra.mxu0 %v2467
    %2469 = vmatprep.subr.mxu0 0.0
    %v2470 = vand.u32 %v126, 4294901760
    %2471 = vmatpush1.msra.mxu0 %v2470
    %2472 = vmatprep.subr.mxu0 0.0
    %v2473 = vand.u32 %v127, 4294901760
    %2474 = vmatpush1.msra.mxu0 %v2473
    %2475 = vmatprep.subr.mxu0 0.0
    %v2476 = vand.u32 %v128, 4294901760
    %2477 = vmatpush1.msra.mxu0 %v2476
    %2478 = vmatprep.subr.mxu0 0.0
    %v2479 = vand.u32 %v129, 4294901760
    %2480 = vmatpush1.msra.mxu0 %v2479
    %2481 = vmatprep.subr.mxu0 0.0
    %v2482 = vand.u32 %v130, 4294901760
    %2483 = vmatpush1.msra.mxu0 %v2482
    %2484 = vmatprep.subr.mxu0 0.0
    %v2485 = vand.u32 %v131, 4294901760
    %2486 = vmatpush1.msra.mxu0 %v2485
    %2487 = vmatprep.subr.mxu0 0.0
    %v2488 = vand.u32 %v132, 4294901760
    %2489 = vmatpush1.msra.mxu0 %v2488
    %2490 = vmatprep.subr.mxu0 0.0
    %v2491 = vand.u32 %v133, 4294901760
    %2492 = vmatpush1.msra.mxu0 %v2491
    %2493 = vmatprep.subr.mxu0 0.0
    %v2494 = vand.u32 %v134, 4294901760
    %2495 = vmatpush1.msra.mxu0 %v2494
    %2496 = vmatprep.subr.mxu0 0.0
    %v2497 = vand.u32 %v135, 4294901760
    %2498 = vmatpush1.msra.mxu0 %v2497
    %v2499 = vand.u32 %v1640, 4294901760
    %2500 = vmatprep.mubr.f32.mxu0 %v2499
    %v2501 = vand.u32 %v1639, 4294901760
    %2502 = vmatmul.mubr.f32.gmra.mrb[0].mxu0 %v2501
    %v2503 = vpop.f32.mrb[0].mxu0
    %v2504 = vadd.f32 %v2400, %v2503
    %v2505 = vpop.f32.mrb[0].mxu0
    %2506 = vdwg.mxu0
    %2507 = vmatprep.subr.mxu0 0.0
    %v2508 = vand.u32 %v136, 4294901760
    %2509 = vmatpush1.msra.mxu0 %v2508
    %2510 = vmatprep.subr.mxu0 0.0
    %v2511 = vand.u32 %v137, 4294901760
    %2512 = vmatpush1.msra.mxu0 %v2511
    %2513 = vmatprep.subr.mxu0 0.0
    %v2514 = vand.u32 %v138, 4294901760
    %2515 = vmatpush1.msra.mxu0 %v2514
    %2516 = vmatprep.subr.mxu0 0.0
    %v2517 = vand.u32 %v139, 4294901760
    %2518 = vmatpush1.msra.mxu0 %v2517
    %2519 = vmatprep.subr.mxu0 0.0
    %v2520 = vand.u32 %v140, 4294901760
    %2521 = vmatpush1.msra.mxu0 %v2520
    %2522 = vmatprep.subr.mxu0 0.0
    %v2523 = vand.u32 %v141, 4294901760
    %2524 = vmatpush1.msra.mxu0 %v2523
    %2525 = vmatprep.subr.mxu0 0.0
    %v2526 = vand.u32 %v142, 4294901760
    %2527 = vmatpush1.msra.mxu0 %v2526
    %2528 = vmatprep.subr.mxu0 0.0
    %v2529 = vand.u32 %v143, 4294901760
    %2530 = vmatpush1.msra.mxu0 %v2529
    %2531 = vmatprep.subr.mxu0 0.0
    %2532 = vmatpush1.msra.mxu0 0.0
    %2533 = vmatprep.subr.mxu0 0.0
    %2534 = vmatpush1.msra.mxu0 0.0
    %2535 = vmatprep.subr.mxu0 0.0
    %2536 = vmatpush1.msra.mxu0 0.0
    %2537 = vmatprep.subr.mxu0 0.0
    %2538 = vmatpush1.msra.mxu0 0.0
    %2539 = vmatprep.subr.mxu0 0.0
    %2540 = vmatpush1.msra.mxu0 0.0
    %2541 = vmatprep.subr.mxu0 0.0
    %2542 = vmatpush1.msra.mxu0 0.0
    %2543 = vmatprep.subr.mxu0 0.0
    %2544 = vmatpush1.msra.mxu0 0.0
    %2545 = vmatprep.subr.mxu0 0.0
    %2546 = vmatpush1.msra.mxu0 0.0
    %2547 = vmatprep.subr.mxu0 0.0
    %2548 = vmatpush1.msra.mxu0 0.0
    %2549 = vmatprep.subr.mxu0 0.0
    %2550 = vmatpush1.msra.mxu0 0.0
    %2551 = vmatprep.subr.mxu0 0.0
    %2552 = vmatpush1.msra.mxu0 0.0
    %2553 = vmatprep.subr.mxu0 0.0
    %2554 = vmatpush1.msra.mxu0 0.0
    %2555 = vmatprep.subr.mxu0 0.0
    %2556 = vmatpush1.msra.mxu0 0.0
    %2557 = vmatprep.subr.mxu0 0.0
    %2558 = vmatpush1.msra.mxu0 0.0
    %2559 = vmatprep.subr.mxu0 0.0
    %2560 = vmatpush1.msra.mxu0 0.0
    %2561 = vmatprep.subr.mxu0 0.0
    %2562 = vmatpush1.msra.mxu0 0.0
    %2563 = vmatprep.subr.mxu0 0.0
    %2564 = vmatpush1.msra.mxu0 0.0
    %2565 = vmatprep.subr.mxu0 0.0
    %2566 = vmatpush1.msra.mxu0 0.0
    %2567 = vmatprep.subr.mxu0 0.0
    %2568 = vmatpush1.msra.mxu0 0.0
    %2569 = vmatprep.subr.mxu0 0.0
    %2570 = vmatpush1.msra.mxu0 0.0
    %2571 = vmatprep.subr.mxu0 0.0
    %2572 = vmatpush1.msra.mxu0 0.0
    %2573 = vmatprep.subr.mxu0 0.0
    %2574 = vmatpush1.msra.mxu0 0.0
    %2575 = vmatprep.subr.mxu0 0.0
    %2576 = vmatpush1.msra.mxu0 0.0
    %2577 = vmatprep.subr.mxu0 0.0
    %2578 = vmatpush1.msra.mxu0 0.0
    %2579 = vmatprep.mubr.f32.mxu0 0.0
    %v2580 = vand.u32 %v1643, 4294901760
    %v2581 = vsub.f32 %v1643, %v2580
    %v2582 = vand.u32 %v2581, 4294901760
    %v2583 = vsub.f32 %v2581, %v2582
    %v2584 = vand.u32 %v2583, 4294901760
    %2585 = vmatmul.mubr.f32.gmra.mrb[0].mxu0 %v2584
    %v2586 = vpop.f32.mrb[0].mxu0
    %v2587 = vadd.f32 %v2504, %v2586
    %v2588 = vpop.f32.mrb[0].mxu0
    %2589 = vdwg.mxu0
    %2590 = vmatprep.subr.mxu0 0.0
    %v2591 = vand.u32 %v136, 4294901760
    %v2592 = vsub.f32 %v136, %v2591
    %v2593 = vand.u32 %v2592, 4294901760
    %v2594 = vsub.f32 %v2592, %v2593
    %v2595 = vand.u32 %v2594, 4294901760
    %2596 = vmatpush1.msra.mxu0 %v2595
    %2597 = vmatprep.subr.mxu0 0.0
    %v2598 = vand.u32 %v137, 4294901760
    %v2599 = vsub.f32 %v137, %v2598
    %v2600 = vand.u32 %v2599, 4294901760
    %v2601 = vsub.f32 %v2599, %v2600
    %v2602 = vand.u32 %v2601, 4294901760
    %2603 = vmatpush1.msra.mxu0 %v2602
    %2604 = vmatprep.subr.mxu0 0.0
    %v2605 = vand.u32 %v138, 4294901760
    %v2606 = vsub.f32 %v138, %v2605
    %v2607 = vand.u32 %v2606, 4294901760
    %v2608 = vsub.f32 %v2606, %v2607
    %v2609 = vand.u32 %v2608, 4294901760
    %2610 = vmatpush1.msra.mxu0 %v2609
    %2611 = vmatprep.subr.mxu0 0.0
    %v2612 = vand.u32 %v139, 4294901760
    %v2613 = vsub.f32 %v139, %v2612
    %v2614 = vand.u32 %v2613, 4294901760
    %v2615 = vsub.f32 %v2613, %v2614
    %v2616 = vand.u32 %v2615, 4294901760
    %2617 = vmatpush1.msra.mxu0 %v2616
    %2618 = vmatprep.subr.mxu0 0.0
    %v2619 = vand.u32 %v140, 4294901760
    %v2620 = vsub.f32 %v140, %v2619
    %v2621 = vand.u32 %v2620, 4294901760
    %v2622 = vsub.f32 %v2620, %v2621
    %v2623 = vand.u32 %v2622, 4294901760
    %2624 = vmatpush1.msra.mxu0 %v2623
    %2625 = vmatprep.subr.mxu0 0.0
    %v2626 = vand.u32 %v141, 4294901760
    %v2627 = vsub.f32 %v141, %v2626
    %v2628 = vand.u32 %v2627, 4294901760
    %v2629 = vsub.f32 %v2627, %v2628
    %v2630 = vand.u32 %v2629, 4294901760
    %2631 = vmatpush1.msra.mxu0 %v2630
    %2632 = vmatprep.subr.mxu0 0.0
    %v2633 = vand.u32 %v142, 4294901760
    %v2634 = vsub.f32 %v142, %v2633
    %v2635 = vand.u32 %v2634, 4294901760
    %v2636 = vsub.f32 %v2634, %v2635
    %v2637 = vand.u32 %v2636, 4294901760
    %2638 = vmatpush1.msra.mxu0 %v2637
    %2639 = vmatprep.subr.mxu0 0.0
    %v2640 = vand.u32 %v143, 4294901760
    %v2641 = vsub.f32 %v143, %v2640
    %v2642 = vand.u32 %v2641, 4294901760
    %v2643 = vsub.f32 %v2641, %v2642
    %v2644 = vand.u32 %v2643, 4294901760
    %2645 = vmatpush1.msra.mxu0 %v2644
    %2646 = vmatprep.subr.mxu0 0.0
    %2647 = vmatpush1.msra.mxu0 0.0
    %2648 = vmatprep.subr.mxu0 0.0
    %2649 = vmatpush1.msra.mxu0 0.0
    %2650 = vmatprep.subr.mxu0 0.0
    %2651 = vmatpush1.msra.mxu0 0.0
    %2652 = vmatprep.subr.mxu0 0.0
    %2653 = vmatpush1.msra.mxu0 0.0
    %2654 = vmatprep.subr.mxu0 0.0
    %2655 = vmatpush1.msra.mxu0 0.0
    %2656 = vmatprep.subr.mxu0 0.0
    %2657 = vmatpush1.msra.mxu0 0.0
    %2658 = vmatprep.subr.mxu0 0.0
    %2659 = vmatpush1.msra.mxu0 0.0
    %2660 = vmatprep.subr.mxu0 0.0
    %2661 = vmatpush1.msra.mxu0 0.0
    %2662 = vmatprep.subr.mxu0 0.0
    %2663 = vmatpush1.msra.mxu0 0.0
    %2664 = vmatprep.subr.mxu0 0.0
    %2665 = vmatpush1.msra.mxu0 0.0
    %2666 = vmatprep.subr.mxu0 0.0
    %2667 = vmatpush1.msra.mxu0 0.0
    %2668 = vmatprep.subr.mxu0 0.0
    %2669 = vmatpush1.msra.mxu0 0.0
    %2670 = vmatprep.subr.mxu0 0.0
    %2671 = vmatpush1.msra.mxu0 0.0
    %2672 = vmatprep.subr.mxu0 0.0
    %2673 = vmatpush1.msra.mxu0 0.0
    %2674 = vmatprep.subr.mxu0 0.0
    %2675 = vmatpush1.msra.mxu0 0.0
    %2676 = vmatprep.subr.mxu0 0.0
    %2677 = vmatpush1.msra.mxu0 0.0
    %2678 = vmatprep.subr.mxu0 0.0
    %2679 = vmatpush1.msra.mxu0 0.0
    %2680 = vmatprep.subr.mxu0 0.0
    %2681 = vmatpush1.msra.mxu0 0.0
    %2682 = vmatprep.subr.mxu0 0.0
    %2683 = vmatpush1.msra.mxu0 0.0
    %2684 = vmatprep.subr.mxu0 0.0
    %2685 = vmatpush1.msra.mxu0 0.0
    %2686 = vmatprep.subr.mxu0 0.0
    %2687 = vmatpush1.msra.mxu0 0.0
    %2688 = vmatprep.subr.mxu0 0.0
    %2689 = vmatpush1.msra.mxu0 0.0
    %2690 = vmatprep.subr.mxu0 0.0
    %2691 = vmatpush1.msra.mxu0 0.0
    %2692 = vmatprep.subr.mxu0 0.0
    %2693 = vmatpush1.msra.mxu0 0.0
    %2694 = vmatprep.mubr.f32.mxu0 0.0
    %v2695 = vand.u32 %v1643, 4294901760
    %2696 = vmatmul.mubr.f32.gmra.mrb[0].mxu0 %v2695
    %v2697 = vpop.f32.mrb[0].mxu0
    %v2698 = vadd.f32 %v2587, %v2697
    %v2699 = vpop.f32.mrb[0].mxu0
    %2700 = vdwg.mxu0
    %2701 = vmatprep.subr.mxu0 0.0
    %v2702 = vand.u32 %v136, 4294901760
    %v2703 = vsub.f32 %v136, %v2702
    %2704 = vmatpush1.msra.mxu0 %v2703
    %2705 = vmatprep.subr.mxu0 0.0
    %v2706 = vand.u32 %v137, 4294901760
    %v2707 = vsub.f32 %v137, %v2706
    %2708 = vmatpush1.msra.mxu0 %v2707
    %2709 = vmatprep.subr.mxu0 0.0
    %v2710 = vand.u32 %v138, 4294901760
    %v2711 = vsub.f32 %v138, %v2710
    %2712 = vmatpush1.msra.mxu0 %v2711
    %2713 = vmatprep.subr.mxu0 0.0
    %v2714 = vand.u32 %v139, 4294901760
    %v2715 = vsub.f32 %v139, %v2714
    %2716 = vmatpush1.msra.mxu0 %v2715
    %2717 = vmatprep.subr.mxu0 0.0
    %v2718 = vand.u32 %v140, 4294901760
    %v2719 = vsub.f32 %v140, %v2718
    %2720 = vmatpush1.msra.mxu0 %v2719
    %2721 = vmatprep.subr.mxu0 0.0
    %v2722 = vand.u32 %v141, 4294901760
    %v2723 = vsub.f32 %v141, %v2722
    %2724 = vmatpush1.msra.mxu0 %v2723
    %2725 = vmatprep.subr.mxu0 0.0
    %v2726 = vand.u32 %v142, 4294901760
    %v2727 = vsub.f32 %v142, %v2726
    %2728 = vmatpush1.msra.mxu0 %v2727
    %2729 = vmatprep.subr.mxu0 0.0
    %v2730 = vand.u32 %v143, 4294901760
    %v2731 = vsub.f32 %v143, %v2730
    %2732 = vmatpush1.msra.mxu0 %v2731
    %2733 = vmatprep.subr.mxu0 0.0
    %2734 = vmatpush1.msra.mxu0 0.0
    %2735 = vmatprep.subr.mxu0 0.0
    %2736 = vmatpush1.msra.mxu0 0.0
    %2737 = vmatprep.subr.mxu0 0.0
    %2738 = vmatpush1.msra.mxu0 0.0
    %2739 = vmatprep.subr.mxu0 0.0
    %2740 = vmatpush1.msra.mxu0 0.0
    %2741 = vmatprep.subr.mxu0 0.0
    %2742 = vmatpush1.msra.mxu0 0.0
    %2743 = vmatprep.subr.mxu0 0.0
    %2744 = vmatpush1.msra.mxu0 0.0
    %2745 = vmatprep.subr.mxu0 0.0
    %2746 = vmatpush1.msra.mxu0 0.0
    %2747 = vmatprep.subr.mxu0 0.0
    %2748 = vmatpush1.msra.mxu0 0.0
    %2749 = vmatprep.subr.mxu0 0.0
    %2750 = vmatpush1.msra.mxu0 0.0
    %2751 = vmatprep.subr.mxu0 0.0
    %2752 = vmatpush1.msra.mxu0 0.0
    %2753 = vmatprep.subr.mxu0 0.0
    %2754 = vmatpush1.msra.mxu0 0.0
    %2755 = vmatprep.subr.mxu0 0.0
    %2756 = vmatpush1.msra.mxu0 0.0
    %2757 = vmatprep.subr.mxu0 0.0
    %2758 = vmatpush1.msra.mxu0 0.0
    %2759 = vmatprep.subr.mxu0 0.0
    %2760 = vmatpush1.msra.mxu0 0.0
    %2761 = vmatprep.subr.mxu0 0.0
    %2762 = vmatpush1.msra.mxu0 0.0
    %2763 = vmatprep.subr.mxu0 0.0
    %2764 = vmatpush1.msra.mxu0 0.0
    %2765 = vmatprep.subr.mxu0 0.0
    %2766 = vmatpush1.msra.mxu0 0.0
    %2767 = vmatprep.subr.mxu0 0.0
    %2768 = vmatpush1.msra.mxu0 0.0
    %2769 = vmatprep.subr.mxu0 0.0
    %2770 = vmatpush1.msra.mxu0 0.0
    %2771 = vmatprep.subr.mxu0 0.0
    %2772 = vmatpush1.msra.mxu0 0.0
    %2773 = vmatprep.subr.mxu0 0.0
    %2774 = vmatpush1.msra.mxu0 0.0
    %2775 = vmatprep.subr.mxu0 0.0
    %2776 = vmatpush1.msra.mxu0 0.0
    %2777 = vmatprep.subr.mxu0 0.0
    %2778 = vmatpush1.msra.mxu0 0.0
    %2779 = vmatprep.subr.mxu0 0.0
    %2780 = vmatpush1.msra.mxu0 0.0
    %2781 = vmatprep.mubr.f32.mxu0 0.0
    %v2782 = vand.u32 %v1643, 4294901760
    %v2783 = vsub.f32 %v1643, %v2782
    %2784 = vmatmul.mubr.f32.gmra.mrb[0].mxu0 %v2783
    %v2785 = vpop.f32.mrb[0].mxu0
    %v2786 = vadd.f32 %v2698, %v2785
    %v2787 = vpop.f32.mrb[0].mxu0
    %2788 = vdwg.mxu0
    %2789 = vmatprep.subr.mxu0 0.0
    %v2790 = vand.u32 %v136, 4294901760
    %2791 = vmatpush1.msra.mxu0 %v2790
    %2792 = vmatprep.subr.mxu0 0.0
    %v2793 = vand.u32 %v137, 4294901760
    %2794 = vmatpush1.msra.mxu0 %v2793
    %2795 = vmatprep.subr.mxu0 0.0
    %v2796 = vand.u32 %v138, 4294901760
    %2797 = vmatpush1.msra.mxu0 %v2796
    %2798 = vmatprep.subr.mxu0 0.0
    %v2799 = vand.u32 %v139, 4294901760
    %2800 = vmatpush1.msra.mxu0 %v2799
    %2801 = vmatprep.subr.mxu0 0.0
    %v2802 = vand.u32 %v140, 4294901760
    %2803 = vmatpush1.msra.mxu0 %v2802
    %2804 = vmatprep.subr.mxu0 0.0
    %v2805 = vand.u32 %v141, 4294901760
    %2806 = vmatpush1.msra.mxu0 %v2805
    %2807 = vmatprep.subr.mxu0 0.0
    %v2808 = vand.u32 %v142, 4294901760
    %2809 = vmatpush1.msra.mxu0 %v2808
    %2810 = vmatprep.subr.mxu0 0.0
    %v2811 = vand.u32 %v143, 4294901760
    %2812 = vmatpush1.msra.mxu0 %v2811
    %2813 = vmatprep.subr.mxu0 0.0
    %2814 = vmatpush1.msra.mxu0 0.0
    %2815 = vmatprep.subr.mxu0 0.0
    %2816 = vmatpush1.msra.mxu0 0.0
    %2817 = vmatprep.subr.mxu0 0.0
    %2818 = vmatpush1.msra.mxu0 0.0
    %2819 = vmatprep.subr.mxu0 0.0
    %2820 = vmatpush1.msra.mxu0 0.0
    %2821 = vmatprep.subr.mxu0 0.0
    %2822 = vmatpush1.msra.mxu0 0.0
    %2823 = vmatprep.subr.mxu0 0.0
    %2824 = vmatpush1.msra.mxu0 0.0
    %2825 = vmatprep.subr.mxu0 0.0
    %2826 = vmatpush1.msra.mxu0 0.0
    %2827 = vmatprep.subr.mxu0 0.0
    %2828 = vmatpush1.msra.mxu0 0.0
    %2829 = vmatprep.subr.mxu0 0.0
    %2830 = vmatpush1.msra.mxu0 0.0
    %2831 = vmatprep.subr.mxu0 0.0
    %2832 = vmatpush1.msra.mxu0 0.0
    %2833 = vmatprep.subr.mxu0 0.0
    %2834 = vmatpush1.msra.mxu0 0.0
    %2835 = vmatprep.subr.mxu0 0.0
    %2836 = vmatpush1.msra.mxu0 0.0
    %2837 = vmatprep.subr.mxu0 0.0
    %2838 = vmatpush1.msra.mxu0 0.0
    %2839 = vmatprep.subr.mxu0 0.0
    %2840 = vmatpush1.msra.mxu0 0.0
    %2841 = vmatprep.subr.mxu0 0.0
    %2842 = vmatpush1.msra.mxu0 0.0
    %2843 = vmatprep.subr.mxu0 0.0
    %2844 = vmatpush1.msra.mxu0 0.0
    %2845 = vmatprep.subr.mxu0 0.0
    %2846 = vmatpush1.msra.mxu0 0.0
    %2847 = vmatprep.subr.mxu0 0.0
    %2848 = vmatpush1.msra.mxu0 0.0
    %2849 = vmatprep.subr.mxu0 0.0
    %2850 = vmatpush1.msra.mxu0 0.0
    %2851 = vmatprep.subr.mxu0 0.0
    %2852 = vmatpush1.msra.mxu0 0.0
    %2853 = vmatprep.subr.mxu0 0.0
    %2854 = vmatpush1.msra.mxu0 0.0
    %2855 = vmatprep.subr.mxu0 0.0
    %2856 = vmatpush1.msra.mxu0 0.0
    %2857 = vmatprep.subr.mxu0 0.0
    %2858 = vmatpush1.msra.mxu0 0.0
    %2859 = vmatprep.subr.mxu0 0.0
    %2860 = vmatpush1.msra.mxu0 0.0
    %2861 = vmatprep.mubr.f32.mxu0 0.0
    %v2862 = vand.u32 %v1643, 4294901760
    %v2863 = vsub.f32 %v1643, %v2862
    %v2864 = vand.u32 %v2863, 4294901760
    %2865 = vmatmul.mubr.f32.gmra.mrb[0].mxu0 %v2864
    %v2866 = vpop.f32.mrb[0].mxu0
    %v2867 = vadd.f32 %v2786, %v2866
    %v2868 = vpop.f32.mrb[0].mxu0
    %2869 = vdwg.mxu0
    %2870 = vmatprep.subr.mxu0 0.0
    %v2871 = vand.u32 %v136, 4294901760
    %v2872 = vsub.f32 %v136, %v2871
    %v2873 = vand.u32 %v2872, 4294901760
    %2874 = vmatpush1.msra.mxu0 %v2873
    %2875 = vmatprep.subr.mxu0 0.0
    %v2876 = vand.u32 %v137, 4294901760
    %v2877 = vsub.f32 %v137, %v2876
    %v2878 = vand.u32 %v2877, 4294901760
    %2879 = vmatpush1.msra.mxu0 %v2878
    %2880 = vmatprep.subr.mxu0 0.0
    %v2881 = vand.u32 %v138, 4294901760
    %v2882 = vsub.f32 %v138, %v2881
    %v2883 = vand.u32 %v2882, 4294901760
    %2884 = vmatpush1.msra.mxu0 %v2883
    %2885 = vmatprep.subr.mxu0 0.0
    %v2886 = vand.u32 %v139, 4294901760
    %v2887 = vsub.f32 %v139, %v2886
    %v2888 = vand.u32 %v2887, 4294901760
    %2889 = vmatpush1.msra.mxu0 %v2888
    %2890 = vmatprep.subr.mxu0 0.0
    %v2891 = vand.u32 %v140, 4294901760
    %v2892 = vsub.f32 %v140, %v2891
    %v2893 = vand.u32 %v2892, 4294901760
    %2894 = vmatpush1.msra.mxu0 %v2893
    %2895 = vmatprep.subr.mxu0 0.0
    %v2896 = vand.u32 %v141, 4294901760
    %v2897 = vsub.f32 %v141, %v2896
    %v2898 = vand.u32 %v2897, 4294901760
    %2899 = vmatpush1.msra.mxu0 %v2898
    %2900 = vmatprep.subr.mxu0 0.0
    %v2901 = vand.u32 %v142, 4294901760
    %v2902 = vsub.f32 %v142, %v2901
    %v2903 = vand.u32 %v2902, 4294901760
    %2904 = vmatpush1.msra.mxu0 %v2903
    %2905 = vmatprep.subr.mxu0 0.0
    %v2906 = vand.u32 %v143, 4294901760
    %v2907 = vsub.f32 %v143, %v2906
    %v2908 = vand.u32 %v2907, 4294901760
    %2909 = vmatpush1.msra.mxu0 %v2908
    %2910 = vmatprep.subr.mxu0 0.0
    %2911 = vmatpush1.msra.mxu0 0.0
    %2912 = vmatprep.subr.mxu0 0.0
    %2913 = vmatpush1.msra.mxu0 0.0
    %2914 = vmatprep.subr.mxu0 0.0
    %2915 = vmatpush1.msra.mxu0 0.0
    %2916 = vmatprep.subr.mxu0 0.0
    %2917 = vmatpush1.msra.mxu0 0.0
    %2918 = vmatprep.subr.mxu0 0.0
    %2919 = vmatpush1.msra.mxu0 0.0
    %2920 = vmatprep.subr.mxu0 0.0
    %2921 = vmatpush1.msra.mxu0 0.0
    %2922 = vmatprep.subr.mxu0 0.0
    %2923 = vmatpush1.msra.mxu0 0.0
    %2924 = vmatprep.subr.mxu0 0.0
    %2925 = vmatpush1.msra.mxu0 0.0
    %2926 = vmatprep.subr.mxu0 0.0
    %2927 = vmatpush1.msra.mxu0 0.0
    %2928 = vmatprep.subr.mxu0 0.0
    %2929 = vmatpush1.msra.mxu0 0.0
    %2930 = vmatprep.subr.mxu0 0.0
    %2931 = vmatpush1.msra.mxu0 0.0
    %2932 = vmatprep.subr.mxu0 0.0
    %2933 = vmatpush1.msra.mxu0 0.0
    %2934 = vmatprep.subr.mxu0 0.0
    %2935 = vmatpush1.msra.mxu0 0.0
    %2936 = vmatprep.subr.mxu0 0.0
    %2937 = vmatpush1.msra.mxu0 0.0
    %2938 = vmatprep.subr.mxu0 0.0
    %2939 = vmatpush1.msra.mxu0 0.0
    %2940 = vmatprep.subr.mxu0 0.0
    %2941 = vmatpush1.msra.mxu0 0.0
    %2942 = vmatprep.subr.mxu0 0.0
    %2943 = vmatpush1.msra.mxu0 0.0
    %2944 = vmatprep.subr.mxu0 0.0
    %2945 = vmatpush1.msra.mxu0 0.0
    %2946 = vmatprep.subr.mxu0 0.0
    %2947 = vmatpush1.msra.mxu0 0.0
    %2948 = vmatprep.subr.mxu0 0.0
    %2949 = vmatpush1.msra.mxu0 0.0
    %2950 = vmatprep.subr.mxu0 0.0
    %2951 = vmatpush1.msra.mxu0 0.0
    %2952 = vmatprep.subr.mxu0 0.0
    %2953 = vmatpush1.msra.mxu0 0.0
    %2954 = vmatprep.subr.mxu0 0.0
    %2955 = vmatpush1.msra.mxu0 0.0
    %2956 = vmatprep.subr.mxu0 0.0
    %2957 = vmatpush1.msra.mxu0 0.0
    %2958 = vmatprep.mubr.f32.mxu0 0.0
    %v2959 = vand.u32 %v1643, 4294901760
    %2960 = vmatmul.mubr.f32.gmra.mrb[0].mxu0 %v2959
    %v2961 = vpop.f32.mrb[0].mxu0
    %v2962 = vadd.f32 %v2867, %v2961
    %v2963 = vpop.f32.mrb[0].mxu0
    %2964 = vdwg.mxu0
    %2965 = vmatprep.subr.mxu0 0.0
    %v2966 = vand.u32 %v136, 4294901760
    %2967 = vmatpush1.msra.mxu0 %v2966
    %2968 = vmatprep.subr.mxu0 0.0
    %v2969 = vand.u32 %v137, 4294901760
    %2970 = vmatpush1.msra.mxu0 %v2969
    %2971 = vmatprep.subr.mxu0 0.0
    %v2972 = vand.u32 %v138, 4294901760
    %2973 = vmatpush1.msra.mxu0 %v2972
    %2974 = vmatprep.subr.mxu0 0.0
    %v2975 = vand.u32 %v139, 4294901760
    %2976 = vmatpush1.msra.mxu0 %v2975
    %2977 = vmatprep.subr.mxu0 0.0
    %v2978 = vand.u32 %v140, 4294901760
    %2979 = vmatpush1.msra.mxu0 %v2978
    %2980 = vmatprep.subr.mxu0 0.0
    %v2981 = vand.u32 %v141, 4294901760
    %2982 = vmatpush1.msra.mxu0 %v2981
    %2983 = vmatprep.subr.mxu0 0.0
    %v2984 = vand.u32 %v142, 4294901760
    %2985 = vmatpush1.msra.mxu0 %v2984
    %2986 = vmatprep.subr.mxu0 0.0
    %v2987 = vand.u32 %v143, 4294901760
    %2988 = vmatpush1.msra.mxu0 %v2987
    %2989 = vmatprep.subr.mxu0 0.0
    %2990 = vmatpush1.msra.mxu0 0.0
    %2991 = vmatprep.subr.mxu0 0.0
    %2992 = vmatpush1.msra.mxu0 0.0
    %2993 = vmatprep.subr.mxu0 0.0
    %2994 = vmatpush1.msra.mxu0 0.0
    %2995 = vmatprep.subr.mxu0 0.0
    %2996 = vmatpush1.msra.mxu0 0.0
    %2997 = vmatprep.subr.mxu0 0.0
    %2998 = vmatpush1.msra.mxu0 0.0
    %2999 = vmatprep.subr.mxu0 0.0
    %3000 = vmatpush1.msra.mxu0 0.0
    %3001 = vmatprep.subr.mxu0 0.0
    %3002 = vmatpush1.msra.mxu0 0.0
    %3003 = vmatprep.subr.mxu0 0.0
    %3004 = vmatpush1.msra.mxu0 0.0
    %3005 = vmatprep.subr.mxu0 0.0
    %3006 = vmatpush1.msra.mxu0 0.0
    %3007 = vmatprep.subr.mxu0 0.0
    %3008 = vmatpush1.msra.mxu0 0.0
    %3009 = vmatprep.subr.mxu0 0.0
    %3010 = vmatpush1.msra.mxu0 0.0
    %3011 = vmatprep.subr.mxu0 0.0
    %3012 = vmatpush1.msra.mxu0 0.0
    %3013 = vmatprep.subr.mxu0 0.0
    %3014 = vmatpush1.msra.mxu0 0.0
    %3015 = vmatprep.subr.mxu0 0.0
    %3016 = vmatpush1.msra.mxu0 0.0
    %3017 = vmatprep.subr.mxu0 0.0
    %3018 = vmatpush1.msra.mxu0 0.0
    %3019 = vmatprep.subr.mxu0 0.0
    %3020 = vmatpush1.msra.mxu0 0.0
    %3021 = vmatprep.subr.mxu0 0.0
    %3022 = vmatpush1.msra.mxu0 0.0
    %3023 = vmatprep.subr.mxu0 0.0
    %3024 = vmatpush1.msra.mxu0 0.0
    %3025 = vmatprep.subr.mxu0 0.0
    %3026 = vmatpush1.msra.mxu0 0.0
    %3027 = vmatprep.subr.mxu0 0.0
    %3028 = vmatpush1.msra.mxu0 0.0
    %3029 = vmatprep.subr.mxu0 0.0
    %3030 = vmatpush1.msra.mxu0 0.0
    %3031 = vmatprep.subr.mxu0 0.0
    %3032 = vmatpush1.msra.mxu0 0.0
    %3033 = vmatprep.subr.mxu0 0.0
    %3034 = vmatpush1.msra.mxu0 0.0
    %3035 = vmatprep.subr.mxu0 0.0
    %3036 = vmatpush1.msra.mxu0 0.0
    %3037 = vmatprep.mubr.f32.mxu0 0.0
    %v3038 = vand.u32 %v1643, 4294901760
    %3039 = vmatmul.mubr.f32.gmra.mrb[0].mxu0 %v3038
    %v3040 = vpop.f32.mrb[0].mxu0
    %v3041 = vadd.f32 %v2962, %v3040
    %v3042 = vpop.f32.mrb[0].mxu0
    %3043 = vdwg.mxu0
    %v3045 = vcombine.high %v3041, %v3041
    %v3047 = vunpack.c.l.s4 1966171168
    %v3048 = vunpack.c.0.s8 %v3047
    %v3049 = vlaneseq
    %v3050 = vshrl.u32 %v3049, 7
    %v3051 = vsub.s32 %v3048, %v3050
    %v3052 = vrot.slane %v3041, %v3051
    %v3054 = vunpack.c.l.s4 1966171168
    %v3055 = vunpack.c.0.s8 %v3054
    %v3056 = vlaneseq
    %v3057 = vshrl.u32 %v3056, 7
    %v3058 = vsub.s32 %v3055, %v3057
    %v3059 = vrot.slane %v3045, %v3058
    %v3060 = vcombine.high %v3052, %v3052
    %v3061 = vcombine.high %v3059, %v3059
    %v3063 = vunpack.c.l.s4 1966171168
    %v3064 = vunpack.c.0.s8 %v3063
    %v3065 = vlaneseq
    %v3066 = vshrl.u32 %v3065, 7
    %v3067 = vsub.s32 %v3064, %v3066
    %v3068 = vrot.slane %v3052, %v3067
    %v3070 = vunpack.c.l.s4 1966171168
    %v3071 = vunpack.c.0.s8 %v3070
    %v3072 = vlaneseq
    %v3073 = vshrl.u32 %v3072, 7
    %v3074 = vsub.s32 %v3071, %v3073
    %v3075 = vrot.slane %v3059, %v3074
    %v3077 = vunpack.c.l.s4 1966171168
    %v3078 = vunpack.c.0.s8 %v3077
    %v3079 = vlaneseq
    %v3080 = vshrl.u32 %v3079, 7
    %v3081 = vsub.s32 %v3078, %v3080
    %v3082 = vrot.slane %v3060, %v3081
    %v3084 = vunpack.c.l.s4 1966171168
    %v3085 = vunpack.c.0.s8 %v3084
    %v3086 = vlaneseq
    %v3087 = vshrl.u32 %v3086, 7
    %v3088 = vsub.s32 %v3085, %v3087
    %v3089 = vrot.slane %v3061, %v3088
    %v3090 = vcombine.high %v3068, %v3068
    %v3091 = vcombine.high %v3075, %v3075
    %v3092 = vcombine.high %v3082, %v3082
    %v3093 = vcombine.high %v3089, %v3089
    %3102 = vst [vmem:[#allocation8] sm:$0x1] %v3068
    %3103 = vst [vmem:[#allocation8 + $0x1] sm:$0x1] %v3082
    %3104 = vst [vmem:[#allocation8 + $0x2] sm:$0x1] %v3090
    %3105 = vst [vmem:[#allocation8 + $0x3] sm:$0x1] %v3092
    %3106 = vst [vmem:[#allocation8 + $0x4] sm:$0x1] %v3075
    %3107 = vst [vmem:[#allocation8 + $0x5] sm:$0x1] %v3089
    %3108 = vst [vmem:[#allocation8 + $0x6] sm:$0x1] %v3091
    %3109 = vst [vmem:[#allocation8 + $0x7] sm:$0x1] %v3093
    // Predicated region
    $region26: #{tpu_custom_call.1} parent=1 // pred_check
      _
    $region27: #{tpu_custom_call.1} parent=1 // pred_check_branch
      %3111 = sbr.rel (0) target = $region29
    $region28: #{tpu_custom_call.1} parent=1 // pred_region
      %s3113 = ssub.s32 128, 128
      %3114 = vsyncadd [#allocation4], %s3113
      %s3115 = sshll.u32 [#allocation8], 4
      %s3116 = int_to_ptr.vmem [resolvable:$true] %s3115
      %3121 = dma.vmem_to_hbm [thread:$0]  %s3116, 128, %s3, [#allocation4], 16, 16, 1
    $region29: #{tpu_custom_call.1} parent=1 // pred_fallthru
      _
    // Predicated region
    $region30: #{tpu_custom_call.1} parent=1 // pred_check
      _
    $region31: #{tpu_custom_call.1} parent=1 // pred_check_branch
      %3123 = sbr.rel (0) target = $region33
    $region32: #{tpu_custom_call.1} parent=1 // pred_region
      %3124 = dma.done [#allocation4], 128
    $region33: #{tpu_custom_call.1} parent=1 // pred_fallthru
      _
    %3125 = vsyncpa [#allocation3], 1
    %3126 = vsyncpa [#allocation6], 1
    %3127 = vsyncpa [#allocation4], 1

</llo_original>
